<compile_context>
chip_gen: v6e
topology: v6e:2x2x1
jax: 0.10.0
libtpu: 0.0.40
codegen_flags: <defaults>
</compile_context>

<pallas_src>
import math

import jax
import jax.numpy as jnp
from jax.experimental import pallas as pl
from jax.experimental.pallas import tpu as pltpu


def _round_up(x, m):
    return -(-x // m) * m


def _erf(x):
    # Abramowitz & Stegun 7.1.26 (max abs err ~1.5e-7); built only from
    # mul/add/exp/abs/where/div so it lowers cleanly in Mosaic and matches
    # PyTorch nn.GELU()'s exact-erf formulation to f32 tolerance.
    a1, a2, a3, a4, a5 = (0.254829592, -0.284496736, 1.421413741,
                          -1.453152027, 1.061405429)
    p = 0.3275911
    ax = jnp.abs(x)
    # NOTE: if this kernel ever becomes VPU-bound, swap the divide for
    # pl.reciprocal(1.0 + p * ax, approx=True) (EUP slot) and re-run the
    # 1e-4 check (the approximate reciprocal feeds a 5th-order polynomial).
    t = 1.0 / (1.0 + p * ax)
    poly = ((((a5 * t + a4) * t + a3) * t + a2) * t + a1) * t
    y = 1.0 - poly * jnp.exp(-ax * ax)
    return jnp.where(x >= 0, y, -y)


def _gelu_exact(x):
    # nn.GELU() default (approximate='none'): 0.5*x*(1+erf(x/sqrt(2)))
    return 0.5 * x * (1.0 + _erf(x * (1.0 / math.sqrt(2.0))))


def _hyper_kernel(skt_ref, mask_ref, wfc_ref, bfc_ref, w1_ref, b1_ref,
                  w2_ref, b2_ref, out_ref):
    """One grid step = TB independent HyperNetwork.forward evaluations merged
    into a single (ff*TB, .) LHS (row r = p*TB + b, spatial-major) so every
    layer is one full-M MXU matmul and every in-kernel stack is
    tiling-aligned (TB % 8 == 0)."""
    cdt = wfc_ref.dtype
    tb, z = skt_ref.shape
    ffz = mask_ref.shape[1]
    ff = ffz // z

    skt = skt_ref[...].astype(cdt)                            # (TB, z)
    # Lane-tile skt to the block-diagonal column width (no tile_op matmul),
    # then sublane-stack ff copies so row r = p*TB + b carries skt[b], and
    # mask to the block-diagonal fc LHS.
    skt_tiled = jnp.concatenate([skt] * ff, axis=1)           # (TB, ff*z)
    skt_rep = jnp.concatenate([skt_tiled] * ff, axis=0)       # (ff*TB, ff*z)
    lhs = mask_ref[...] * skt_rep                             # (ff*TB, ff*z)

    # fc (Linear + GELU): (ff*TB, ff*z) @ (ff*z, hid) -> (ff*TB, hid)
    fea = jnp.dot(lhs, wfc_ref[...], preferred_element_type=jnp.float32)
    fea = _gelu_exact(fea + bfc_ref[...])

    # conv1 (1x1 conv + GELU): (ff*TB, hid) @ (hid, 2*hid)
    h = jnp.dot(fea.astype(cdt), w1_ref[...], preferred_element_type=jnp.float32)
    h = _gelu_exact(h + b1_ref[...])

    # conv2 (1x1 conv): (ff*TB, 2*hid) @ (2*hid, n_pad), lane-dense store
    ker = jnp.dot(h.astype(cdt), w2_ref[...], preferred_element_type=jnp.float32)
    ker = ker + b2_ref[...]

    out_ref[0] = ker.astype(out_ref.dtype)


def prepare_params(params, *, z_dim, f_size, out_size, in_size, hid,
                   compute_dtype=jnp.float32):
    """One-time (load-time) rearrangement of the torch parameters into
    (P, C)-layout matmul operands plus the static block-diagonal mask.
    compute_dtype=jnp.bfloat16 halves MXU operand width / weight DMA on
    v5e, v6e and v7x alike (all bf16-native MXUs); matmul accumulation,
    biases and GELU always stay f32.  Keep the f32 default for 1e-4
    validation against the exact-erf reference."""
    ff = f_size * f_size
    n_out = out_size * in_size
    n_pad = _round_up(n_out, 128)      # lane-dense output width

    w_fc = jnp.asarray(params["w_fc"], jnp.float32)
    b_fc = jnp.asarray(params["b_fc"], jnp.float32)
    w1 = jnp.asarray(params["w1"], jnp.float32).reshape(2 * hid, hid)
    b1 = jnp.asarray(params["b1"], jnp.float32)
    w2 = jnp.asarray(params["w2"], jnp.float32).reshape(n_out, 2 * hid)
    b2 = jnp.asarray(params["b2"], jnp.float32)

    # torch fc weight: (hid*ff, z_dim), output index n = c*ff + p
    #   -> wfc_blk[p*z + zz, c] = w_fc[c*ff + p, zz]
    wfc_blk = (w_fc.reshape(hid, ff, z_dim)
                   .transpose(1, 2, 0)
                   .reshape(ff * z_dim, hid))
    bfc_mat = b_fc.reshape(hid, ff).T                               # (ff, hid)
    w1t = w1.T                                                      # (hid, 2*hid)
    b1r = b1.reshape(1, 2 * hid)
    # conv2 weight/bias, lane-padded with zero columns to n_pad.
    w2t = jnp.zeros((2 * hid, n_pad), jnp.float32).at[:, :n_out].set(w2.T)
    b2r = jnp.zeros((1, n_pad), jnp.float32).at[:, :n_out].set(b2)

    # Static block-diagonal mask: blk_mask[p, q] = (q // z == p).
    q = jnp.arange(ff * z_dim)
    blk_mask = (q[None, :] // z_dim == jnp.arange(ff)[:, None])     # (ff, ff*z)

    cdt = compute_dtype
    return {
        "blk_mask": blk_mask.astype(cdt),
        "wfc_blk": wfc_blk.astype(cdt),
        "bfc_mat": bfc_mat,          # biases stay f32 (added post-matmul in f32)
        "w1t": w1t.astype(cdt),
        "b1r": b1r,
        "w2t": w2t.astype(cdt),
        "b2r": b2r,
    }


def _choose_tb(B, tb_max=32):
    """Batch-block size: a multiple of 8 (keeps in-kernel stacks tiling
    aligned), sized so TB*ff approaches the MXU M dimension (tb_max=32 ->
    288 rows with ff=9; use 16 to target v5e's 128-row MXU), and kept small
    enough that there are >= 2 grid steps when the batch allows, so v7x's two
    TensorCores both get work via the "parallel" grid axis."""
    if _round_up(B, 8) <= 8:
        return 8
    return max(8, min(tb_max, _round_up(-(-B // 2), 8)))


def make_hypernetwork_forward(prepared, *, z_dim, f_size, out_size, in_size,
                              hid, tb_max=32):
    """Returns a jitted forward: skt (B, z_dim) -> (B, out, in, f, f).
    Each batch row is one independent HyperNetwork.forward (module is batch-1);
    TB of them are evaluated per grid step."""
    ff = f_size * f_size
    n_out = out_size * in_size
    n_pad = prepared["w2t"].shape[1]

    def const_spec(arr):
        # Full-array block, constant index_map -> fetched once and VMEM
        # resident across grid steps (the pipeliner does not re-DMA a block
        # whose index is unchanged); per-step traffic is only the skt block in
        # and one output block out.  Total constants are far below the scoped
        # VMEM limit on every generation, so no explicit single-buffering is
        # needed.
        return pl.BlockSpec(arr.shape, lambda g, _nd=arr.ndim: (0,) * _nd)

    @jax.jit
    def forward(skt):
        B = skt.shape[0]
        tb = _choose_tb(B, tb_max)
        n_steps = -(-B // tb)
        b_pad = n_steps * tb

        # Pad the batch up to a multiple of TB (padded rows are sliced off
        # below) — no reliance on partial-edge-block semantics.
        skt_pad = jnp.zeros((b_pad, z_dim), jnp.float32)
        skt_pad = skt_pad.at[:B].set(skt.astype(jnp.float32))

        # Row ordering inside a block is r = p*tb + b -> pre-repeat the
        # p-indexed constants along sublanes once per trace (constant-folded).
        mask_rep = jnp.repeat(prepared["blk_mask"], tb, axis=0)   # (ff*tb, ff*z)
        bfc_rep = jnp.repeat(prepared["bfc_mat"], tb, axis=0)     # (ff*tb, hid)
        consts = (mask_rep, prepared["wfc_blk"], bfc_rep, prepared["w1t"],
                  prepared["b1r"], prepared["w2t"], prepared["b2r"])

        grid_spec = pltpu.PrefetchScalarGridSpec(
            num_scalar_prefetch=0,
            grid=(n_steps,),
            in_specs=[pl.BlockSpec((tb, z_dim), lambda g: (g, 0))]
                     + [const_spec(c) for c in consts],
            out_specs=pl.BlockSpec((1, ff * tb, n_pad), lambda g: (g, 0, 0)),
        )

        ker_blocks = pl.pallas_call(
            _hyper_kernel,
            out_shape=jax.ShapeDtypeStruct((n_steps, ff * tb, n_pad),
                                           jnp.float32),
            grid_spec=grid_spec,
            compiler_params=pltpu.CompilerParams(
                dimension_semantics=("parallel",)),
        )(skt_pad, *consts)

        # Undo the in-block p-major row ordering, drop batch padding and lane
        # padding, then apply the module's final view (all fused under jit).
        ker = ker_blocks.reshape(n_steps, ff, tb, n_pad).transpose(0, 2, 1, 3)
        ker = ker.reshape(b_pad, ff, n_pad)[:B, :, :n_out]
        ker = ker.transpose(0, 2, 1)                 # (B, n_out, ff)
        return ker.reshape(B, out_size, in_size, f_size, f_size)

    return forward


def hypernetwork_reference(skt, params, *, z_dim, f_size, out_size, in_size, hid):
    """Pure-JAX reference mirroring the PyTorch module (NCHW), batch-1 skt."""
    def gelu(x):
        return 0.5 * x * (1.0 + jax.scipy.special.erf(x / jnp.sqrt(2.0)))

    fc = gelu(skt @ params["w_fc"].T + params["b_fc"])          # (1, hid*ff)
    fea = fc.reshape(-1, hid, f_size, f_size)                   # NCHW
    w1 = params["w1"].reshape(2 * hid, hid)
    h = gelu(jnp.einsum("oc,bchw->bohw", w1, fea)
             + params["b1"][None, :, None, None])
    w2 = params["w2"].reshape(out_size * in_size, 2 * hid)
    ker = (jnp.einsum("ko,bohw->bkhw", w2, h)
           + params["b2"][None, :, None, None])
    return ker.reshape(out_size, in_size, f_size, f_size)


if __name__ == "__main__":
    # Small shapes consistent with the module; B independent hypernetwork
    # evaluations (e.g. one per conv layer / latent) share one pallas_call.
    # B=12 exercises batch-block padding (12 -> 16) and a 2-step parallel grid.
    z_dim, f_size, out_size, in_size, hid = 32, 3, 8, 8, 16
    B = 12

    key = jax.random.PRNGKey(0)
    ks = jax.random.split(key, 7)
    params = {
        "w_fc": 0.1 * jax.random.normal(ks[0], (hid * f_size * f_size, z_dim), jnp.float32),
        "b_fc": 0.1 * jax.random.normal(ks[1], (hid * f_size * f_size,), jnp.float32),
        "w1":   0.1 * jax.random.normal(ks[2], (2 * hid, hid, 1, 1), jnp.float32),
        "b1":   0.1 * jax.random.normal(ks[3], (2 * hid,), jnp.float32),
        "w2":   0.1 * jax.random.normal(ks[4], (out_size * in_size, 2 * hid, 1, 1), jnp.float32),
        "b2":   0.1 * jax.random.normal(ks[5], (out_size * in_size,), jnp.float32),
    }
    skt = jax.random.normal(ks[6], (B, z_dim), jnp.float32)

    prepared = prepare_params(params, z_dim=z_dim, f_size=f_size,
                              out_size=out_size, in_size=in_size, hid=hid)
    forward = make_hypernetwork_forward(prepared, z_dim=z_dim, f_size=f_size,
                                        out_size=out_size, in_size=in_size,
                                        hid=hid)

    out = jax.block_until_ready(forward(skt))
    assert out.shape == (B, out_size, in_size, f_size, f_size), out.shape

    for b in range(B):
        ref = hypernetwork_reference(skt[b:b + 1], params, z_dim=z_dim,
                                     f_size=f_size, out_size=out_size,
                                     in_size=in_size, hid=hid)
        err = float(jnp.max(jnp.abs(out[b] - ref)))
        assert jnp.allclose(out[b], ref, atol=1e-4, rtol=1e-4), err

    print("KERNEL_OK")
</pallas_src>

<mosaic_0001>
module attributes {stable_mosaic.version = 11 : i64} {
  func.func @_hyper_kernel(%arg0: i32, %arg1: memref<8x32xf32, #tpu.memory_space<vmem>>, %arg2: memref<72x288xf32, #tpu.memory_space<vmem>>, %arg3: memref<288x16xf32, #tpu.memory_space<vmem>>, %arg4: memref<72x16xf32, #tpu.memory_space<vmem>>, %arg5: memref<16x32xf32, #tpu.memory_space<vmem>>, %arg6: memref<1x32xf32, #tpu.memory_space<vmem>>, %arg7: memref<32x128xf32, #tpu.memory_space<vmem>>, %arg8: memref<1x128xf32, #tpu.memory_space<vmem>>, %arg9: memref<1x72x128xf32, #tpu.memory_space<vmem>>) attributes {dimension_semantics = [#tpu.dimension_semantics<parallel>], iteration_bounds = array<i64: 2>, scalar_prefetch = 0 : i64, scratch_operands = 0 : i64, tpu.core_type = #tpu.core_type<tc>, window_params = [{transform_indices = @transform_0, window_bounds = array<i64: 8, 32>}, {pipeline_mode = #tpu.pipeline_mode<synchronous>, transform_indices = @transform_1, window_bounds = array<i64: 72, 288>}, {pipeline_mode = #tpu.pipeline_mode<synchronous>, transform_indices = @transform_2, window_bounds = array<i64: 288, 16>}, {pipeline_mode = #tpu.pipeline_mode<synchronous>, transform_indices = @transform_3, window_bounds = array<i64: 72, 16>}, {pipeline_mode = #tpu.pipeline_mode<synchronous>, transform_indices = @transform_4, window_bounds = array<i64: 16, 32>}, {pipeline_mode = #tpu.pipeline_mode<synchronous>, transform_indices = @transform_5, window_bounds = array<i64: 1, 32>}, {pipeline_mode = #tpu.pipeline_mode<synchronous>, transform_indices = @transform_6, window_bounds = array<i64: 32, 128>}, {pipeline_mode = #tpu.pipeline_mode<synchronous>, transform_indices = @transform_7, window_bounds = array<i64: 1, 128>}, {transform_indices = @transform_8, window_bounds = array<i64: 1, 72, 128>}]} {
    %c0 = arith.constant 0 : index
    %c0_0 = arith.constant 0 : index
    %0 = vector.load %arg1[%c0, %c0_0] : memref<8x32xf32, #tpu.memory_space<vmem>>, vector<8x32xf32>
    %1 = tpu.concatenate %0, %0, %0, %0, %0, %0, %0, %0, %0 in 1 : vector<8x32xf32>, vector<8x32xf32>, vector<8x32xf32>, vector<8x32xf32>, vector<8x32xf32>, vector<8x32xf32>, vector<8x32xf32>, vector<8x32xf32>, vector<8x32xf32> -> vector<8x288xf32>
    %2 = tpu.concatenate %1, %1, %1, %1, %1, %1, %1, %1, %1 in 0 : vector<8x288xf32>, vector<8x288xf32>, vector<8x288xf32>, vector<8x288xf32>, vector<8x288xf32>, vector<8x288xf32>, vector<8x288xf32>, vector<8x288xf32>, vector<8x288xf32> -> vector<72x288xf32>
    %c0_1 = arith.constant 0 : index
    %c0_2 = arith.constant 0 : index
    %3 = vector.load %arg2[%c0_1, %c0_2] : memref<72x288xf32, #tpu.memory_space<vmem>>, vector<72x288xf32>
    %4 = arith.mulf %3, %2 : vector<72x288xf32>
    %c0_3 = arith.constant 0 : index
    %c0_4 = arith.constant 0 : index
    %5 = vector.load %arg3[%c0_3, %c0_4] : memref<288x16xf32, #tpu.memory_space<vmem>>, vector<288x16xf32>
    %cst = arith.constant dense<0.000000e+00> : vector<72x16xf32>
    %6 = tpu.matmul %4, %5, %cst {dimension_numbers = #tpu.dot_dimension_numbers<[1], [0], [0], [1], [0, 0, 1, 1], [], []>} : vector<72x288xf32>, vector<288x16xf32>, vector<72x16xf32> -> vector<72x16xf32>
    %c0_5 = arith.constant 0 : index
    %c0_6 = arith.constant 0 : index
    %7 = vector.load %arg4[%c0_5, %c0_6] : memref<72x16xf32, #tpu.memory_space<vmem>>, vector<72x16xf32>
    %8 = arith.addf %6, %7 : vector<72x16xf32>
    %cst_7 = arith.constant 5.000000e-01 : f32
    %9 = vector.broadcast %cst_7 : f32 to vector<72x16xf32>
    %10 = arith.mulf %9, %8 : vector<72x16xf32>
    %cst_8 = arith.constant 0.707106769 : f32
    %11 = vector.broadcast %cst_8 : f32 to vector<72x16xf32>
    %12 = arith.mulf %8, %11 : vector<72x16xf32>
    %13 = math.absf %12 : vector<72x16xf32>
    %cst_9 = arith.constant 0.327591091 : f32
    %14 = vector.broadcast %cst_9 : f32 to vector<72x16xf32>
    %15 = arith.mulf %14, %13 : vector<72x16xf32>
    %cst_10 = arith.constant 1.000000e+00 : f32
    %16 = vector.broadcast %cst_10 : f32 to vector<72x16xf32>
    %17 = arith.addf %16, %15 : vector<72x16xf32>
    %cst_11 = arith.constant 1.000000e+00 : f32
    %18 = vector.broadcast %cst_11 : f32 to vector<72x16xf32>
    %19 = arith.divf %18, %17 : vector<72x16xf32>
    %cst_12 = arith.constant 1.06140542 : f32
    %20 = vector.broadcast %cst_12 : f32 to vector<72x16xf32>
    %21 = arith.mulf %20, %19 : vector<72x16xf32>
    %cst_13 = arith.constant -1.45315206 : f32
    %22 = vector.broadcast %cst_13 : f32 to vector<72x16xf32>
    %23 = arith.addf %21, %22 : vector<72x16xf32>
    %24 = arith.mulf %23, %19 : vector<72x16xf32>
    %cst_14 = arith.constant 1.42141378 : f32
    %25 = vector.broadcast %cst_14 : f32 to vector<72x16xf32>
    %26 = arith.addf %24, %25 : vector<72x16xf32>
    %27 = arith.mulf %26, %19 : vector<72x16xf32>
    %cst_15 = arith.constant -0.284496725 : f32
    %28 = vector.broadcast %cst_15 : f32 to vector<72x16xf32>
    %29 = arith.addf %27, %28 : vector<72x16xf32>
    %30 = arith.mulf %29, %19 : vector<72x16xf32>
    %cst_16 = arith.constant 0.254829586 : f32
    %31 = vector.broadcast %cst_16 : f32 to vector<72x16xf32>
    %32 = arith.addf %30, %31 : vector<72x16xf32>
    %33 = arith.mulf %32, %19 : vector<72x16xf32>
    %cst_17 = arith.constant 0.000000e+00 : f32
    %34 = vector.broadcast %cst_17 : f32 to vector<72x16xf32>
    %35 = arith.subf %34, %13 : vector<72x16xf32>
    %36 = arith.mulf %35, %13 : vector<72x16xf32>
    %37 = math.exp %36 : vector<72x16xf32>
    %38 = arith.mulf %33, %37 : vector<72x16xf32>
    %cst_18 = arith.constant 1.000000e+00 : f32
    %39 = vector.broadcast %cst_18 : f32 to vector<72x16xf32>
    %40 = arith.subf %39, %38 : vector<72x16xf32>
    %cst_19 = arith.constant 0.000000e+00 : f32
    %41 = vector.broadcast %cst_19 : f32 to vector<72x16xf32>
    %42 = arith.cmpf oge, %12, %41 : vector<72x16xf32>
    %cst_20 = arith.constant 0.000000e+00 : f32
    %43 = vector.broadcast %cst_20 : f32 to vector<72x16xf32>
    %44 = arith.subf %43, %40 : vector<72x16xf32>
    %45 = arith.select %42, %40, %44 : vector<72x16xi1>, vector<72x16xf32>
    %cst_21 = arith.constant 1.000000e+00 : f32
    %46 = vector.broadcast %cst_21 : f32 to vector<72x16xf32>
    %47 = arith.addf %46, %45 : vector<72x16xf32>
    %48 = arith.mulf %10, %47 : vector<72x16xf32>
    %c0_22 = arith.constant 0 : index
    %c0_23 = arith.constant 0 : index
    %49 = vector.load %arg5[%c0_22, %c0_23] : memref<16x32xf32, #tpu.memory_space<vmem>>, vector<16x32xf32>
    %cst_24 = arith.constant dense<0.000000e+00> : vector<72x32xf32>
    %50 = tpu.matmul %48, %49, %cst_24 {dimension_numbers = #tpu.dot_dimension_numbers<[1], [0], [0], [1], [0, 0, 1, 1], [], []>} : vector<72x16xf32>, vector<16x32xf32>, vector<72x32xf32> -> vector<72x32xf32>
    %c0_25 = arith.constant 0 : index
    %c0_26 = arith.constant 0 : index
    %51 = vector.load %arg6[%c0_25, %c0_26] : memref<1x32xf32, #tpu.memory_space<vmem>>, vector<1x32xf32>
    %52 = vector.broadcast %51 : vector<1x32xf32> to vector<72x32xf32>
    %53 = arith.addf %50, %52 : vector<72x32xf32>
    %cst_27 = arith.constant 5.000000e-01 : f32
    %54 = vector.broadcast %cst_27 : f32 to vector<72x32xf32>
    %55 = arith.mulf %54, %53 : vector<72x32xf32>
    %cst_28 = arith.constant 0.707106769 : f32
    %56 = vector.broadcast %cst_28 : f32 to vector<72x32xf32>
    %57 = arith.mulf %53, %56 : vector<72x32xf32>
    %58 = math.absf %57 : vector<72x32xf32>
    %cst_29 = arith.constant 0.327591091 : f32
    %59 = vector.broadcast %cst_29 : f32 to vector<72x32xf32>
    %60 = arith.mulf %59, %58 : vector<72x32xf32>
    %cst_30 = arith.constant 1.000000e+00 : f32
    %61 = vector.broadcast %cst_30 : f32 to vector<72x32xf32>
    %62 = arith.addf %61, %60 : vector<72x32xf32>
    %cst_31 = arith.constant 1.000000e+00 : f32
    %63 = vector.broadcast %cst_31 : f32 to vector<72x32xf32>
    %64 = arith.divf %63, %62 : vector<72x32xf32>
    %cst_32 = arith.constant 1.06140542 : f32
    %65 = vector.broadcast %cst_32 : f32 to vector<72x32xf32>
    %66 = arith.mulf %65, %64 : vector<72x32xf32>
    %cst_33 = arith.constant -1.45315206 : f32
    %67 = vector.broadcast %cst_33 : f32 to vector<72x32xf32>
    %68 = arith.addf %66, %67 : vector<72x32xf32>
    %69 = arith.mulf %68, %64 : vector<72x32xf32>
    %cst_34 = arith.constant 1.42141378 : f32
    %70 = vector.broadcast %cst_34 : f32 to vector<72x32xf32>
    %71 = arith.addf %69, %70 : vector<72x32xf32>
    %72 = arith.mulf %71, %64 : vector<72x32xf32>
    %cst_35 = arith.constant -0.284496725 : f32
    %73 = vector.broadcast %cst_35 : f32 to vector<72x32xf32>
    %74 = arith.addf %72, %73 : vector<72x32xf32>
    %75 = arith.mulf %74, %64 : vector<72x32xf32>
    %cst_36 = arith.constant 0.254829586 : f32
    %76 = vector.broadcast %cst_36 : f32 to vector<72x32xf32>
    %77 = arith.addf %75, %76 : vector<72x32xf32>
    %78 = arith.mulf %77, %64 : vector<72x32xf32>
    %cst_37 = arith.constant 0.000000e+00 : f32
    %79 = vector.broadcast %cst_37 : f32 to vector<72x32xf32>
    %80 = arith.subf %79, %58 : vector<72x32xf32>
    %81 = arith.mulf %80, %58 : vector<72x32xf32>
    %82 = math.exp %81 : vector<72x32xf32>
    %83 = arith.mulf %78, %82 : vector<72x32xf32>
    %cst_38 = arith.constant 1.000000e+00 : f32
    %84 = vector.broadcast %cst_38 : f32 to vector<72x32xf32>
    %85 = arith.subf %84, %83 : vector<72x32xf32>
    %cst_39 = arith.constant 0.000000e+00 : f32
    %86 = vector.broadcast %cst_39 : f32 to vector<72x32xf32>
    %87 = arith.cmpf oge, %57, %86 : vector<72x32xf32>
    %cst_40 = arith.constant 0.000000e+00 : f32
    %88 = vector.broadcast %cst_40 : f32 to vector<72x32xf32>
    %89 = arith.subf %88, %85 : vector<72x32xf32>
    %90 = arith.select %87, %85, %89 : vector<72x32xi1>, vector<72x32xf32>
    %cst_41 = arith.constant 1.000000e+00 : f32
    %91 = vector.broadcast %cst_41 : f32 to vector<72x32xf32>
    %92 = arith.addf %91, %90 : vector<72x32xf32>
    %93 = arith.mulf %55, %92 : vector<72x32xf32>
    %c0_42 = arith.constant 0 : index
    %c0_43 = arith.constant 0 : index
    %94 = vector.load %arg7[%c0_42, %c0_43] : memref<32x128xf32, #tpu.memory_space<vmem>>, vector<32x128xf32>
    %cst_44 = arith.constant dense<0.000000e+00> : vector<72x128xf32>
    %95 = tpu.matmul %93, %94, %cst_44 {dimension_numbers = #tpu.dot_dimension_numbers<[1], [0], [0], [1], [0, 0, 1, 1], [], []>} : vector<72x32xf32>, vector<32x128xf32>, vector<72x128xf32> -> vector<72x128xf32>
    %c0_45 = arith.constant 0 : index
    %c0_46 = arith.constant 0 : index
    %96 = vector.load %arg8[%c0_45, %c0_46] : memref<1x128xf32, #tpu.memory_space<vmem>>, vector<1x128xf32>
    %97 = vector.broadcast %96 : vector<1x128xf32> to vector<72x128xf32>
    %98 = arith.addf %95, %97 : vector<72x128xf32>
    %c0_47 = arith.constant 0 : index
    %c0_48 = arith.constant 0 : index
    %c0_49 = arith.constant 0 : index
    %99 = vector.load %arg9[%c0_47, %c0_48, %c0_49] : memref<1x72x128xf32, #tpu.memory_space<vmem>>, vector<1x72x128xf32>
    %100 = vector.shape_cast %99 : vector<1x72x128xf32> to vector<72x128xf32>
    %101 = vector.shape_cast %98 : vector<72x128xf32> to vector<1x72x128xf32>
    tpu.vector_store %arg9[%c0_47, %c0_48, %c0_49], %101 {strides = array<i32>} : memref<1x72x128xf32, #tpu.memory_space<vmem>>, vector<1x72x128xf32>,
    return
  }
  func.func @transform_0(%arg0: i32) -> (i32, i32) {
    %c0_i32 = arith.constant 0 : i32
    %c0_i32_0 = arith.constant 0 : i32
    return %arg0, %c0_i32 : i32, i32
  }
  func.func @transform_1(%arg0: i32) -> (i32, i32) {
    %c0_i32 = arith.constant 0 : i32
    %c0_i32_0 = arith.constant 0 : i32
    %c0_i32_1 = arith.constant 0 : i32
    return %c0_i32, %c0_i32_0 : i32, i32
  }
  func.func @transform_2(%arg0: i32) -> (i32, i32) {
    %c0_i32 = arith.constant 0 : i32
    %c0_i32_0 = arith.constant 0 : i32
    %c0_i32_1 = arith.constant 0 : i32
    return %c0_i32, %c0_i32_0 : i32, i32
  }
  func.func @transform_3(%arg0: i32) -> (i32, i32) {
    %c0_i32 = arith.constant 0 : i32
    %c0_i32_0 = arith.constant 0 : i32
    %c0_i32_1 = arith.constant 0 : i32
    return %c0_i32, %c0_i32_0 : i32, i32
  }
  func.func @transform_4(%arg0: i32) -> (i32, i32) {
    %c0_i32 = arith.constant 0 : i32
    %c0_i32_0 = arith.constant 0 : i32
    %c0_i32_1 = arith.constant 0 : i32
    return %c0_i32, %c0_i32_0 : i32, i32
  }
  func.func @transform_5(%arg0: i32) -> (i32, i32) {
    %c0_i32 = arith.constant 0 : i32
    %c0_i32_0 = arith.constant 0 : i32
    %c0_i32_1 = arith.constant 0 : i32
    return %c0_i32, %c0_i32_0 : i32, i32
  }
  func.func @transform_6(%arg0: i32) -> (i32, i32) {
    %c0_i32 = arith.constant 0 : i32
    %c0_i32_0 = arith.constant 0 : i32
    %c0_i32_1 = arith.constant 0 : i32
    return %c0_i32, %c0_i32_0 : i32, i32
  }
  func.func @transform_7(%arg0: i32) -> (i32, i32) {
    %c0_i32 = arith.constant 0 : i32
    %c0_i32_0 = arith.constant 0 : i32
    %c0_i32_1 = arith.constant 0 : i32
    return %c0_i32, %c0_i32_0 : i32, i32
  }
  func.func @transform_8(%arg0: i32) -> (i32, i32, i32) {
    %c0_i32 = arith.constant 0 : i32
    %c0_i32_0 = arith.constant 0 : i32
    %c0_i32_1 = arith.constant 0 : i32
    return %arg0, %c0_i32, %c0_i32_0 : i32, i32, i32
  }
}

</mosaic_0001>

<llo_original>
// kernel: forward.1
$region0: #{forward.1}
  #allocation0 [shape = 'u32[]', space=smem, size = 0x4, offset = 0x4, fixed_abs, tag = 'smem constant byte address 0x4 - core index']
  #allocation1 [shape = 'u32[144,128]{1,0:T(1,128)}', space=vmem, size = 0x12000, scoped, tag = 'internal scratch']
  %s0 = inlined_call_operand.vmem [shape: f32[16,32], index: 0, kind: input, shape index: {}]
  %s1 = inlined_call_operand.vmem [shape: f32[72,288], index: 1, kind: input, shape index: {}]
  %s2 = inlined_call_operand.vmem [shape: f32[288,16], index: 2, kind: input, shape index: {}]
  %s3 = inlined_call_operand.vmem [shape: f32[72,16], index: 3, kind: input, shape index: {}]
  %s4 = inlined_call_operand.hbm [shape: f32[16,32], index: 4, kind: input, shape index: {}]
  %s5 = inlined_call_operand.vmem [shape: f32[1,32], index: 5, kind: input, shape index: {}]
  %s6 = inlined_call_operand.vmem [shape: f32[32,128], index: 6, kind: input, shape index: {}]
  %s7 = inlined_call_operand.vmem [shape: f32[1,128], index: 7, kind: input, shape index: {}]
  %s8 = inlined_call_operand.vmem [shape: f32[2,72,128], index: 8, kind: output, shape index: {}]
  %s9 = sld [smem:[#allocation0]]
  $region69: #{forward.1} parent=0
    _
  %s11 = ssub.s32 1, %s9
  %s12 = scalar_select 0, %s11, %s9
  $region1: #{forward.1} parent=0
    #allocation2 [shape = 'u8[8192]{0}', space=vmem, size = 0x2000, scoped, tag = 'input window, operand 4, single buffered']
    #allocation3 [shape = 's32[2]{0}', space=sflag, size = 0x8, scoped, tag = 'scoped memory for forward.1']
    %13 = vsyncpa [#allocation3], 0
    loop: start=0, step=1, limit=4
    $region2: #{forward.1} parent=1 // loop_pre_header
      _
    $region3: #{forward.1} parent=1 // loop_header
      %s15 = sphi 0, %s19
      %p16 = scmp.ge.s32.totalorder %s15, 4
      %s25 = sphi 0, %s27
      %s28 = sphi 0, %s25
      %s29 = sphi 0, %s28
      %s45 = sphi 0, %s29
      %s49 = sphi 0, %s49
      %s51 = sphi 0, %s49
      %s52 = sphi 0, %s51
      %s66 = sphi 0, %s52
      %s70 = sphi 0, %s70
      %s72 = sphi 0, %s70
      %s73 = sphi 0, %s72
      %s87 = sphi 0, %s73
      %s91 = sphi 0, %s91
      %s93 = sphi 0, %s91
      %s94 = sphi 0, %s93
      %s108 = sphi 0, %s94
      %s112 = sphi 0, %s112
      %s114 = sphi 0, %s112
      %s115 = sphi 0, %s114
      %s129 = sphi 0, %s115
      %s133 = sphi 0, %s133
      %s135 = sphi 0, %s133
      %s136 = sphi 0, %s135
      %s150 = sphi 0, %s136
      %s154 = sphi 0, %s154
      %s156 = sphi 0, %s154
      %s157 = sphi 0, %s156
      %s171 = sphi 0, %s157
      %s175 = sphi 0, %s175
      %s177 = sphi 0, %s175
      %s178 = sphi 0, %s177
      %s192 = sphi 0, %s178
      %s198 = sphi 0, %s200
      %s201 = sphi 0, %s198
      %s202 = sphi 0, %s201
      %s218 = sphi 0, %s202
    $region4: #{forward.1} parent=1 // loop_header_branch
      %18 = sbr.rel (%p16) target = $region8
    $region5: #{forward.1} parent=1 // loop_body
      %s20 = ssub.s32 %s15, 1
      %s21 = ssub.s32 %s15, 2
      %s22 = sadd.s32 %s15, 1
      %s23 = ssub.s32 %s15, %s22
      %p24 = scmp.eq.s32.totalorder %s23, 0
      %s26 = sadd.s32 %s25, 1
      %s27 = scalar_select %p24, %s25, %s26
      %p30 = pneg %p24
      %p31 = scmp.eq.s32.totalorder %s15, 1
      %p32 = por %p30, %p31
      %p33 = scmp.ne.s32.totalorder %s25, %s28
      %p34 = scmp.eq.s32.totalorder %s15, 0
      %p35 = por %p33, %p34
      %p36 = scmp.ne.s32.totalorder %s25, %s28
      %p37 = scmp.eq.s32.totalorder %s20, 1
      %p38 = por %p36, %p37
      %p39 = scmp.ne.s32.totalorder %s28, %s29
      %p40 = scmp.eq.s32.totalorder %s20, 0
      %p41 = por %p39, %p40
      %p42 = scmp.ne.s32.totalorder %s28, %s29
      %p43 = scmp.eq.s32.totalorder %s21, 1
      %p44 = por %p42, %p43
      %p46 = scmp.ne.s32.totalorder %s29, %s45
      %p47 = scmp.eq.s32.totalorder %s21, 0
      %p48 = por %p46, %p47
      %s50 = sadd.s32 %s49, 1
      %p53 = scmp.eq.s32.totalorder %s15, 1
      %p54 = scmp.ne.s32.totalorder %s49, %s51
      %p55 = scmp.eq.s32.totalorder %s15, 0
      %p56 = por %p54, %p55
      %p57 = scmp.ne.s32.totalorder %s49, %s51
      %p58 = scmp.eq.s32.totalorder %s20, 1
      %p59 = por %p57, %p58
      %p60 = scmp.ne.s32.totalorder %s51, %s52
      %p61 = scmp.eq.s32.totalorder %s20, 0
      %p62 = por %p60, %p61
      %p63 = scmp.ne.s32.totalorder %s51, %s52
      %p64 = scmp.eq.s32.totalorder %s21, 1
      %p65 = por %p63, %p64
      %p67 = scmp.ne.s32.totalorder %s52, %s66
      %p68 = scmp.eq.s32.totalorder %s21, 0
      %p69 = por %p67, %p68
      %s71 = sadd.s32 %s70, 1
      %p74 = scmp.eq.s32.totalorder %s15, 1
      %p75 = scmp.ne.s32.totalorder %s70, %s72
      %p76 = scmp.eq.s32.totalorder %s15, 0
      %p77 = por %p75, %p76
      %p78 = scmp.ne.s32.totalorder %s70, %s72
      %p79 = scmp.eq.s32.totalorder %s20, 1
      %p80 = por %p78, %p79
      %p81 = scmp.ne.s32.totalorder %s72, %s73
      %p82 = scmp.eq.s32.totalorder %s20, 0
      %p83 = por %p81, %p82
      %p84 = scmp.ne.s32.totalorder %s72, %s73
      %p85 = scmp.eq.s32.totalorder %s21, 1
      %p86 = por %p84, %p85
      %p88 = scmp.ne.s32.totalorder %s73, %s87
      %p89 = scmp.eq.s32.totalorder %s21, 0
      %p90 = por %p88, %p89
      %s92 = sadd.s32 %s91, 1
      %p95 = scmp.eq.s32.totalorder %s15, 1
      %p96 = scmp.ne.s32.totalorder %s91, %s93
      %p97 = scmp.eq.s32.totalorder %s15, 0
      %p98 = por %p96, %p97
      %p99 = scmp.ne.s32.totalorder %s91, %s93
      %p100 = scmp.eq.s32.totalorder %s20, 1
      %p101 = por %p99, %p100
      %p102 = scmp.ne.s32.totalorder %s93, %s94
      %p103 = scmp.eq.s32.totalorder %s20, 0
      %p104 = por %p102, %p103
      %p105 = scmp.ne.s32.totalorder %s93, %s94
      %p106 = scmp.eq.s32.totalorder %s21, 1
      %p107 = por %p105, %p106
      %p109 = scmp.ne.s32.totalorder %s94, %s108
      %p110 = scmp.eq.s32.totalorder %s21, 0
      %p111 = por %p109, %p110
      %s113 = sadd.s32 %s112, 1
      %p116 = scmp.eq.s32.totalorder %s15, 1
      %p117 = scmp.ne.s32.totalorder %s112, %s114
      %p118 = scmp.eq.s32.totalorder %s15, 0
      %p119 = por %p117, %p118
      %p120 = scmp.ne.s32.totalorder %s112, %s114
      %p121 = scmp.eq.s32.totalorder %s20, 1
      %p122 = por %p120, %p121
      %p123 = scmp.ne.s32.totalorder %s114, %s115
      %p124 = scmp.eq.s32.totalorder %s20, 0
      %p125 = por %p123, %p124
      %p126 = scmp.ne.s32.totalorder %s114, %s115
      %p127 = scmp.eq.s32.totalorder %s21, 1
      %p128 = por %p126, %p127
      %p130 = scmp.ne.s32.totalorder %s115, %s129
      %p131 = scmp.eq.s32.totalorder %s21, 0
      %p132 = por %p130, %p131
      %s134 = sadd.s32 %s133, 1
      %p137 = scmp.eq.s32.totalorder %s15, 1
      %p138 = scmp.ne.s32.totalorder %s133, %s135
      %p139 = scmp.eq.s32.totalorder %s15, 0
      %p140 = por %p138, %p139
      %p141 = scmp.ne.s32.totalorder %s133, %s135
      %p142 = scmp.eq.s32.totalorder %s20, 1
      %p143 = por %p141, %p142
      %p144 = scmp.ne.s32.totalorder %s135, %s136
      %p145 = scmp.eq.s32.totalorder %s20, 0
      %p146 = por %p144, %p145
      %p147 = scmp.ne.s32.totalorder %s135, %s136
      %p148 = scmp.eq.s32.totalorder %s21, 1
      %p149 = por %p147, %p148
      %p151 = scmp.ne.s32.totalorder %s136, %s150
      %p152 = scmp.eq.s32.totalorder %s21, 0
      %p153 = por %p151, %p152
      %s155 = sadd.s32 %s154, 1
      %p158 = scmp.eq.s32.totalorder %s15, 1
      %p159 = scmp.ne.s32.totalorder %s154, %s156
      %p160 = scmp.eq.s32.totalorder %s15, 0
      %p161 = por %p159, %p160
      %p162 = scmp.ne.s32.totalorder %s154, %s156
      %p163 = scmp.eq.s32.totalorder %s20, 1
      %p164 = por %p162, %p163
      %p165 = scmp.ne.s32.totalorder %s156, %s157
      %p166 = scmp.eq.s32.totalorder %s20, 0
      %p167 = por %p165, %p166
      %p168 = scmp.ne.s32.totalorder %s156, %s157
      %p169 = scmp.eq.s32.totalorder %s21, 1
      %p170 = por %p168, %p169
      %p172 = scmp.ne.s32.totalorder %s157, %s171
      %p173 = scmp.eq.s32.totalorder %s21, 0
      %p174 = por %p172, %p173
      %s176 = sadd.s32 %s175, 1
      %p179 = scmp.eq.s32.totalorder %s15, 1
      %p180 = scmp.ne.s32.totalorder %s175, %s177
      %p181 = scmp.eq.s32.totalorder %s15, 0
      %p182 = por %p180, %p181
      %p183 = scmp.ne.s32.totalorder %s175, %s177
      %p184 = scmp.eq.s32.totalorder %s20, 1
      %p185 = por %p183, %p184
      %p186 = scmp.ne.s32.totalorder %s177, %s178
      %p187 = scmp.eq.s32.totalorder %s20, 0
      %p188 = por %p186, %p187
      %p189 = scmp.ne.s32.totalorder %s177, %s178
      %p190 = scmp.eq.s32.totalorder %s21, 1
      %p191 = por %p189, %p190
      %p193 = scmp.ne.s32.totalorder %s178, %s192
      %p194 = scmp.eq.s32.totalorder %s21, 0
      %p195 = por %p193, %p194
      %s196 = ssub.s32 %s15, %s22
      %p197 = scmp.eq.s32.totalorder %s196, 0
      %s199 = sadd.s32 %s198, 1
      %s200 = scalar_select %p197, %s198, %s199
      %p203 = pneg %p197
      %p204 = scmp.eq.s32.totalorder %s15, 1
      %p205 = por %p203, %p204
      %p206 = scmp.ne.s32.totalorder %s198, %s201
      %p207 = scmp.eq.s32.totalorder %s15, 0
      %p208 = por %p206, %p207
      %p209 = scmp.ne.s32.totalorder %s198, %s201
      %p210 = scmp.eq.s32.totalorder %s20, 1
      %p211 = por %p209, %p210
      %p212 = scmp.ne.s32.totalorder %s201, %s202
      %p213 = scmp.eq.s32.totalorder %s20, 0
      %p214 = por %p212, %p213
      %p215 = scmp.ne.s32.totalorder %s201, %s202
      %p216 = scmp.eq.s32.totalorder %s21, 1
      %p217 = por %p215, %p216
      %p219 = scmp.ne.s32.totalorder %s202, %s218
      %p220 = scmp.eq.s32.totalorder %s21, 0
      %p221 = por %p219, %p220
      %p222 = scmp.le.s32.totalorder 1, %s15
      %p223 = scmp.lt.s32.totalorder %s15, 3
      %p224 = pnand %p222, %p223
      %p225 = pneg %p224
      // Predicated region
      $region9: #{forward.1} parent=5 // pred_check
        _
      $region10: #{forward.1} parent=5 // pred_check_branch
        %227 = sbr.rel (%p224) target = $region12
      $region11: #{forward.1} parent=5 // pred_region
        %s228 = ssub.s32 %s15, 1
        // Predicated region
        $region13: #{forward.1} parent=11 // pred_check
          %p229 = pneg %p62
        $region14: #{forward.1} parent=11 // pred_check_branch
          %231 = sbr.rel (%p229) target = $region16
        $region15: #{forward.1} parent=11 // pred_region
          _
        $region16: #{forward.1} parent=11 // pred_fallthru
          _
        // Predicated region
        $region17: #{forward.1} parent=11 // pred_check
          %p232 = pneg %p83
        $region18: #{forward.1} parent=11 // pred_check_branch
          %234 = sbr.rel (%p232) target = $region20
        $region19: #{forward.1} parent=11 // pred_region
          _
        $region20: #{forward.1} parent=11 // pred_fallthru
          _
        // Predicated region
        $region21: #{forward.1} parent=11 // pred_check
          %p235 = pneg %p104
        $region22: #{forward.1} parent=11 // pred_check_branch
          %237 = sbr.rel (%p235) target = $region24
        $region23: #{forward.1} parent=11 // pred_region
          _
        $region24: #{forward.1} parent=11 // pred_fallthru
          _
        // Predicated region
        $region25: #{forward.1} parent=11 // pred_check
          %p238 = pneg %p125
        $region26: #{forward.1} parent=11 // pred_check_branch
          %240 = sbr.rel (%p238) target = $region28
        $region27: #{forward.1} parent=11 // pred_region
          %s242 = ssub.s32 256, 256
          %243 = vsyncadd [#allocation3], %s242
          %s244 = sshll.u32 [#allocation2], 4
          %s245 = int_to_ptr.vmem [resolvable:$true] %s244
          %250 = dma.hbm_to_vmem [thread:$0]  %s4, 256, %s245, [#allocation3], 128, 128, 8
        $region28: #{forward.1} parent=11 // pred_fallthru
          _
        // Predicated region
        $region29: #{forward.1} parent=11 // pred_check
          %p251 = pneg %p146
        $region30: #{forward.1} parent=11 // pred_check_branch
          %253 = sbr.rel (%p251) target = $region32
        $region31: #{forward.1} parent=11 // pred_region
          _
        $region32: #{forward.1} parent=11 // pred_fallthru
          _
        // Predicated region
        $region33: #{forward.1} parent=11 // pred_check
          %p254 = pneg %p167
        $region34: #{forward.1} parent=11 // pred_check_branch
          %256 = sbr.rel (%p254) target = $region36
        $region35: #{forward.1} parent=11 // pred_region
          _
        $region36: #{forward.1} parent=11 // pred_fallthru
          _
        // Predicated region
        $region37: #{forward.1} parent=11 // pred_check
          %p257 = pneg %p188
        $region38: #{forward.1} parent=11 // pred_check_branch
          %259 = sbr.rel (%p257) target = $region40
        $region39: #{forward.1} parent=11 // pred_region
          _
        $region40: #{forward.1} parent=11 // pred_fallthru
          _
      $region12: #{forward.1} parent=5 // pred_fallthru
        _
      %p260 = scmp.lt.s32.totalorder %s15, 2
      // Predicated region
      $region41: #{forward.1} parent=5 // pred_check
        %p261 = pneg %p260
      $region42: #{forward.1} parent=5 // pred_check_branch
        %263 = sbr.rel (%p261) target = $region44
      $region43: #{forward.1} parent=5 // pred_region
        // Predicated region
        $region45: #{forward.1} parent=43 // pred_check
          %p264 = pneg %p35
        $region46: #{forward.1} parent=43 // pred_check_branch
          %266 = sbr.rel (%p264) target = $region48
        $region47: #{forward.1} parent=43 // pred_region
          %p267 = scmp.lt.s32.totalorder %s15, 1
          %s268 = scalar_select %p267, %s15, 1
          %s269 = smul.addr %s268, 8
          %s270 = scalar_lea.vmem %s0, %s269
        $region48: #{forward.1} parent=43 // pred_fallthru
          _
      $region44: #{forward.1} parent=5 // pred_fallthru
        _
      %p271 = scmp.le.s32.totalorder 1, %s15
      %p272 = scmp.lt.s32.totalorder %s15, 3
      %p273 = pnand %p271, %p272
      %p274 = pneg %p273
      // Predicated region
      $region49: #{forward.1} parent=5 // pred_check
        _
      $region50: #{forward.1} parent=5 // pred_check_branch
        %276 = sbr.rel (%p273) target = $region52
      $region51: #{forward.1} parent=5 // pred_region
        %s277 = ssub.s32 %s15, 1
        // Predicated region
        $region53: #{forward.1} parent=51 // pred_check
          %p278 = pneg %p125
        $region54: #{forward.1} parent=51 // pred_check_branch
          %280 = sbr.rel (%p278) target = $region56
        $region55: #{forward.1} parent=51 // pred_region
          %281 = dma.done [#allocation3], 256
        $region56: #{forward.1} parent=51 // pred_fallthru
          _
        %p282 = scmp.lt.s32.totalorder %s20, 1
        %s283 = scalar_select %p282, %s20, 1
        %s284 = smul.addr %s283, 8
        %s285 = scalar_lea.vmem %s0, %s284
        %p286 = pneg %p41
        %p287 = pneg %p38
        %p288 = pneg %p62
        %p289 = pneg %p59
        %p290 = pneg %p83
        %p291 = pneg %p80
        %p292 = pneg %p104
        %p293 = pneg %p101
        %p294 = pneg %p125
        %p295 = pneg %p122
        %p296 = pneg %p146
        %p297 = pneg %p143
        %p298 = pneg %p167
        %p299 = pneg %p164
        %p300 = pneg %p188
        %p301 = pneg %p185
        %p302 = pneg %p214
        %p303 = pneg %p211
        %p304 = scmp.lt.s32.totalorder %s20, 1
        %s305 = scalar_select %p304, %s20, 1
        %s306 = smul.addr %s305, 9
        %s307 = smul.addr %s306, 8
        %s308 = scalar_lea.vmem %s8, %s307
        %p309 = scmp.lt.s32.totalorder %s20, 1
        %s310 = scalar_select %p309, %s20, 1
        %s311 = smul.addr %s310, 8
        %s312 = scalar_lea.vmem %s0, %s311
        %p313 = scmp.lt.s32.totalorder %s20, 1
        %s314 = scalar_select %p313, %s20, 1
        %s315 = smul.addr %s314, 9
        %s316 = smul.addr %s315, 8
        %s317 = scalar_lea.vmem %s8, %s316
        %v318 = vld [vmem:[%s312] sm:$0xff]
        %320 = vrot.lane.b32.xlu0 %v318, 32
        %v321 = vpop.permute.xlu0 %320
        %323 = vrot.lane.b32.xlu0 %v318, 64
        %v324 = vpop.permute.xlu0 %323
        %326 = vrot.lane.b32.xlu0 %v318, 96
        %v327 = vpop.permute.xlu0 %326
        %vm329 = vcmask 261120
        %v330 = vsel %vm329, %v318, %v321
        %vm331 = vcmask 523264
        %v332 = vsel %vm331, %v330, %v324
        %vm333 = vcmask 785408
        %v334 = vsel %vm333, %v332, %v327
        %v335 = vld [vmem:[%s1] sm:$0xff]
        %v336 = vld [vmem:[%s1 + $0x8] sm:$0xff]
        %v337 = vld [vmem:[%s1 + $0x10] sm:$0xff]
        %v338 = vld [vmem:[%s1 + $0x18] sm:$0xff]
        %v339 = vld [vmem:[%s1 + $0x20] sm:$0xff]
        %v340 = vld [vmem:[%s1 + $0x28] sm:$0xff]
        %v341 = vld [vmem:[%s1 + $0x30] sm:$0xff]
        %v342 = vld [vmem:[%s1 + $0x38] sm:$0xff]
        %v343 = vld [vmem:[%s1 + $0x40] sm:$0xff]
        %v344 = vld [vmem:[%s1 + $0x48] sm:$0xff]
        %v345 = vld [vmem:[%s1 + $0x50] sm:$0xff]
        %v346 = vld [vmem:[%s1 + $0x58] sm:$0xff]
        %v347 = vld [vmem:[%s1 + $0x60] sm:$0xff]
        %v348 = vld [vmem:[%s1 + $0x68] sm:$0xff]
        %v349 = vld [vmem:[%s1 + $0x70] sm:$0xff]
        %v350 = vld [vmem:[%s1 + $0x78] sm:$0xff]
        %v351 = vld [vmem:[%s1 + $0x80] sm:$0xff]
        %v352 = vld [vmem:[%s1 + $0x88] sm:$0xff]
        %v353 = vld [vmem:[%s1 + $0x90] sm:$0xff]
        %v354 = vld [vmem:[%s1 + $0x98] sm:$0xff]
        %v355 = vld [vmem:[%s1 + $0xa0] sm:$0xff]
        %v356 = vld [vmem:[%s1 + $0xa8] sm:$0xff]
        %v357 = vld [vmem:[%s1 + $0xb0] sm:$0xff]
        %v358 = vld [vmem:[%s1 + $0xb8] sm:$0xff]
        %v359 = vld [vmem:[%s1 + $0xc0] sm:$0xff]
        %v360 = vld [vmem:[%s1 + $0xc8] sm:$0xff]
        %v361 = vld [vmem:[%s1 + $0xd0] sm:$0xff]
        %v362 = vmul.f32 %v335, %v334
        %v363 = vmul.f32 %v336, %v334
        %v364 = vmul.f32 %v337, %v318
        %v365 = vmul.f32 %v338, %v334
        %v366 = vmul.f32 %v339, %v334
        %v367 = vmul.f32 %v340, %v318
        %v368 = vmul.f32 %v341, %v334
        %v369 = vmul.f32 %v342, %v334
        %v370 = vmul.f32 %v343, %v318
        %v371 = vmul.f32 %v344, %v334
        %v372 = vmul.f32 %v345, %v334
        %v373 = vmul.f32 %v346, %v318
        %v374 = vmul.f32 %v347, %v334
        %v375 = vmul.f32 %v348, %v334
        %v376 = vmul.f32 %v349, %v318
        %v377 = vmul.f32 %v350, %v334
        %v378 = vmul.f32 %v351, %v334
        %v379 = vmul.f32 %v352, %v318
        %v380 = vmul.f32 %v353, %v334
        %v381 = vmul.f32 %v354, %v334
        %v382 = vmul.f32 %v355, %v318
        %v383 = vmul.f32 %v356, %v334
        %v384 = vmul.f32 %v357, %v334
        %v385 = vmul.f32 %v358, %v318
        %v386 = vmul.f32 %v359, %v334
        %v387 = vmul.f32 %v360, %v334
        %v388 = vmul.f32 %v361, %v318
        %v389 = vld [vmem:[%s2] sm:$0xff]
        %v390 = vld [vmem:[%s2 + $0x8] sm:$0xff]
        %v391 = vld [vmem:[%s2 + $0x10] sm:$0xff]
        %v392 = vld [vmem:[%s2 + $0x18] sm:$0xff]
        %v393 = vld [vmem:[%s2 + $0x20] sm:$0xff]
        %v394 = vld [vmem:[%s2 + $0x28] sm:$0xff]
        %v395 = vld [vmem:[%s2 + $0x30] sm:$0xff]
        %v396 = vld [vmem:[%s2 + $0x38] sm:$0xff]
        %v397 = vld [vmem:[%s2 + $0x40] sm:$0xff]
        %v398 = vld [vmem:[%s2 + $0x48] sm:$0xff]
        %v399 = vld [vmem:[%s2 + $0x50] sm:$0xff]
        %v400 = vld [vmem:[%s2 + $0x58] sm:$0xff]
        %v401 = vld [vmem:[%s2 + $0x60] sm:$0xff]
        %v402 = vld [vmem:[%s2 + $0x68] sm:$0xff]
        %v403 = vld [vmem:[%s2 + $0x70] sm:$0xff]
        %v404 = vld [vmem:[%s2 + $0x78] sm:$0xff]
        %v405 = vld [vmem:[%s2 + $0x80] sm:$0xff]
        %v406 = vld [vmem:[%s2 + $0x88] sm:$0xff]
        %v407 = vld [vmem:[%s2 + $0x90] sm:$0xff]
        %v408 = vld [vmem:[%s2 + $0x98] sm:$0xff]
        %v409 = vld [vmem:[%s2 + $0xa0] sm:$0xff]
        %v410 = vld [vmem:[%s2 + $0xa8] sm:$0xff]
        %v411 = vld [vmem:[%s2 + $0xb0] sm:$0xff]
        %v412 = vld [vmem:[%s2 + $0xb8] sm:$0xff]
        %v413 = vld [vmem:[%s2 + $0xc0] sm:$0xff]
        %v414 = vld [vmem:[%s2 + $0xc8] sm:$0xff]
        %v415 = vld [vmem:[%s2 + $0xd0] sm:$0xff]
        %v416 = vld [vmem:[%s2 + $0xd8] sm:$0xff]
        %v417 = vld [vmem:[%s2 + $0xe0] sm:$0xff]
        %v418 = vld [vmem:[%s2 + $0xe8] sm:$0xff]
        %v419 = vld [vmem:[%s2 + $0xf0] sm:$0xff]
        %v420 = vld [vmem:[%s2 + $0xf8] sm:$0xff]
        %v421 = vld [vmem:[%s2 + $0x100] sm:$0xff]
        %v422 = vld [vmem:[%s2 + $0x108] sm:$0xff]
        %v423 = vld [vmem:[%s2 + $0x110] sm:$0xff]
        %v424 = vld [vmem:[%s2 + $0x118] sm:$0xff]
        %v425 = vld [vmem:[%s3] sm:$0xff]
        %v426 = vld [vmem:[%s3 + $0x8] sm:$0xff]
        %v427 = vld [vmem:[%s3 + $0x10] sm:$0xff]
        %v428 = vld [vmem:[%s3 + $0x18] sm:$0xff]
        %v429 = vld [vmem:[%s3 + $0x20] sm:$0xff]
        %v430 = vld [vmem:[%s3 + $0x28] sm:$0xff]
        %v431 = vld [vmem:[%s3 + $0x30] sm:$0xff]
        %v432 = vld [vmem:[%s3 + $0x38] sm:$0xff]
        %v433 = vld [vmem:[%s3 + $0x40] sm:$0xff]
        %v435 = vsel %vm329, %v364, 0
        %v438 = vsel %vm329, %v367, 0
        %v441 = vsel %vm329, %v370, 0
        %v444 = vsel %vm329, %v373, 0
        %v447 = vsel %vm329, %v376, 0
        %v450 = vsel %vm329, %v379, 0
        %v453 = vsel %vm329, %v382, 0
        %v456 = vsel %vm329, %v385, 0
        %v459 = vsel %vm329, %v388, 0
        %461 = vmatprep.subr.mxu0 0.0
        %462 = vmatpush1.msra.mxu0 %v404
        %463 = vmatprep.subr.mxu0 0.0
        %464 = vmatpush1.msra.mxu0 %v403
        %465 = vmatprep.subr.mxu0 0.0
        %466 = vmatpush1.msra.mxu0 %v402
        %467 = vmatprep.subr.mxu0 0.0
        %468 = vmatpush1.msra.mxu0 %v401
        %469 = vmatprep.subr.mxu0 0.0
        %470 = vmatpush1.msra.mxu0 %v400
        %471 = vmatprep.subr.mxu0 0.0
        %472 = vmatpush1.msra.mxu0 %v399
        %473 = vmatprep.subr.mxu0 0.0
        %474 = vmatpush1.msra.mxu0 %v398
        %475 = vmatprep.subr.mxu0 0.0
        %476 = vmatpush1.msra.mxu0 %v397
        %477 = vmatprep.subr.mxu0 0.0
        %478 = vmatpush1.msra.mxu0 %v396
        %479 = vmatprep.subr.mxu0 0.0
        %480 = vmatpush1.msra.mxu0 %v395
        %481 = vmatprep.subr.mxu0 0.0
        %482 = vmatpush1.msra.mxu0 %v394
        %483 = vmatprep.subr.mxu0 0.0
        %484 = vmatpush1.msra.mxu0 %v393
        %485 = vmatprep.subr.mxu0 0.0
        %486 = vmatpush1.msra.mxu0 %v392
        %487 = vmatprep.subr.mxu0 0.0
        %488 = vmatpush1.msra.mxu0 %v391
        %489 = vmatprep.subr.mxu0 0.0
        %490 = vmatpush1.msra.mxu0 %v390
        %491 = vmatprep.subr.mxu0 0.0
        %492 = vmatpush1.msra.mxu0 %v389
        %493 = vmatprep.subr.mxu0 0.0
        %494 = vmatpush2.msra.mxu0 %v420
        %495 = vmatprep.subr.mxu0 0.0
        %496 = vmatpush2.msra.mxu0 %v419
        %497 = vmatprep.subr.mxu0 0.0
        %498 = vmatpush2.msra.mxu0 %v418
        %499 = vmatprep.subr.mxu0 0.0
        %500 = vmatpush2.msra.mxu0 %v417
        %501 = vmatprep.subr.mxu0 0.0
        %502 = vmatpush2.msra.mxu0 %v416
        %503 = vmatprep.subr.mxu0 0.0
        %504 = vmatpush2.msra.mxu0 %v415
        %505 = vmatprep.subr.mxu0 0.0
        %506 = vmatpush2.msra.mxu0 %v414
        %507 = vmatprep.subr.mxu0 0.0
        %508 = vmatpush2.msra.mxu0 %v413
        %509 = vmatprep.subr.mxu0 0.0
        %510 = vmatpush2.msra.mxu0 %v412
        %511 = vmatprep.subr.mxu0 0.0
        %512 = vmatpush2.msra.mxu0 %v411
        %513 = vmatprep.subr.mxu0 0.0
        %514 = vmatpush2.msra.mxu0 %v410
        %515 = vmatprep.subr.mxu0 0.0
        %516 = vmatpush2.msra.mxu0 %v409
        %517 = vmatprep.subr.mxu0 0.0
        %518 = vmatpush2.msra.mxu0 %v408
        %519 = vmatprep.subr.mxu0 0.0
        %520 = vmatpush2.msra.mxu0 %v407
        %521 = vmatprep.subr.mxu0 0.0
        %522 = vmatpush2.msra.mxu0 %v406
        %523 = vmatprep.subr.mxu0 0.0
        %524 = vmatpush2.msra.mxu0 %v405
        %525 = vmatprep.mubr.f32.mxu0 %v363
        %526 = vmatmul.mubr.f32.gmra.mxu0 %v362
        %v527 = vpop.f32.mrf.mxu0
        %v528 = vadd.f32 %v425, %v527
        %v529 = vpop.f32.mrf.mxu0
        %530 = vmatprep.mubr.f32.mxu0 %v366
        %531 = vmatmul.mubr.f32.gmra.mxu0 %v365
        %v532 = vpop.f32.mrf.mxu0
        %v533 = vadd.f32 %v426, %v532
        %v534 = vpop.f32.mrf.mxu0
        %535 = vmatprep.mubr.f32.mxu0 %v369
        %536 = vmatmul.mubr.f32.gmra.mxu0 %v368
        %v537 = vpop.f32.mrf.mxu0
        %v538 = vadd.f32 %v427, %v537
        %v539 = vpop.f32.mrf.mxu0
        %540 = vmatprep.mubr.f32.mxu0 %v372
        %541 = vmatmul.mubr.f32.gmra.mxu0 %v371
        %v542 = vpop.f32.mrf.mxu0
        %v543 = vadd.f32 %v428, %v542
        %v544 = vpop.f32.mrf.mxu0
        %545 = vmatprep.mubr.f32.mxu0 %v375
        %546 = vmatmul.mubr.f32.gmra.mxu0 %v374
        %v547 = vpop.f32.mrf.mxu0
        %v548 = vadd.f32 %v429, %v547
        %v549 = vpop.f32.mrf.mxu0
        %550 = vmatprep.mubr.f32.mxu0 %v378
        %551 = vmatmul.mubr.f32.gmra.mxu0 %v377
        %v552 = vpop.f32.mrf.mxu0
        %v553 = vadd.f32 %v430, %v552
        %v554 = vpop.f32.mrf.mxu0
        %555 = vmatprep.mubr.f32.mxu0 %v381
        %556 = vmatmul.mubr.f32.gmra.mxu0 %v380
        %v557 = vpop.f32.mrf.mxu0
        %v558 = vadd.f32 %v431, %v557
        %v559 = vpop.f32.mrf.mxu0
        %560 = vmatprep.mubr.f32.mxu0 %v384
        %561 = vmatmul.mubr.f32.gmra.mxu0 %v383
        %v562 = vpop.f32.mrf.mxu0
        %v563 = vadd.f32 %v432, %v562
        %v564 = vpop.f32.mrf.mxu0
        %565 = vmatprep.mubr.f32.mxu0 %v387
        %566 = vmatmul.mubr.f32.gmra.mxu0 %v386
        %v567 = vpop.f32.mrf.mxu0
        %v568 = vadd.f32 %v433, %v567
        %v569 = vpop.f32.mrf.mxu0
        %570 = vdwg.mxu0
        %571 = vmatprep.subr.mxu0 0.0
        %572 = vmatpush1.msra.mxu0 0.0
        %573 = vmatprep.subr.mxu0 0.0
        %574 = vmatpush1.msra.mxu0 0.0
        %575 = vmatprep.subr.mxu0 0.0
        %576 = vmatpush1.msra.mxu0 0.0
        %577 = vmatprep.subr.mxu0 0.0
        %578 = vmatpush1.msra.mxu0 0.0
        %579 = vmatprep.subr.mxu0 0.0
        %580 = vmatpush1.msra.mxu0 0.0
        %581 = vmatprep.subr.mxu0 0.0
        %582 = vmatpush1.msra.mxu0 0.0
        %583 = vmatprep.subr.mxu0 0.0
        %584 = vmatpush1.msra.mxu0 0.0
        %585 = vmatprep.subr.mxu0 0.0
        %586 = vmatpush1.msra.mxu0 0.0
        %587 = vmatprep.subr.mxu0 0.0
        %588 = vmatpush1.msra.mxu0 0.0
        %589 = vmatprep.subr.mxu0 0.0
        %590 = vmatpush1.msra.mxu0 0.0
        %591 = vmatprep.subr.mxu0 0.0
        %592 = vmatpush1.msra.mxu0 0.0
        %593 = vmatprep.subr.mxu0 0.0
        %594 = vmatpush1.msra.mxu0 0.0
        %595 = vmatprep.subr.mxu0 0.0
        %596 = vmatpush1.msra.mxu0 %v424
        %597 = vmatprep.subr.mxu0 0.0
        %598 = vmatpush1.msra.mxu0 %v423
        %599 = vmatprep.subr.mxu0 0.0
        %600 = vmatpush1.msra.mxu0 %v422
        %601 = vmatprep.subr.mxu0 0.0
        %602 = vmatpush1.msra.mxu0 %v421
        %603 = vmatprep.subr.mxu0 0.0
        %604 = vmatpush2.msra.mxu0 0.0
        %605 = vmatprep.subr.mxu0 0.0
        %606 = vmatpush2.msra.mxu0 0.0
        %607 = vmatprep.subr.mxu0 0.0
        %608 = vmatpush2.msra.mxu0 0.0
        %609 = vmatprep.subr.mxu0 0.0
        %610 = vmatpush2.msra.mxu0 0.0
        %611 = vmatprep.subr.mxu0 0.0
        %612 = vmatpush2.msra.mxu0 0.0
        %613 = vmatprep.subr.mxu0 0.0
        %614 = vmatpush2.msra.mxu0 0.0
        %615 = vmatprep.subr.mxu0 0.0
        %616 = vmatpush2.msra.mxu0 0.0
        %617 = vmatprep.subr.mxu0 0.0
        %618 = vmatpush2.msra.mxu0 0.0
        %619 = vmatprep.subr.mxu0 0.0
        %620 = vmatpush2.msra.mxu0 0.0
        %621 = vmatprep.subr.mxu0 0.0
        %622 = vmatpush2.msra.mxu0 0.0
        %623 = vmatprep.subr.mxu0 0.0
        %624 = vmatpush2.msra.mxu0 0.0
        %625 = vmatprep.subr.mxu0 0.0
        %626 = vmatpush2.msra.mxu0 0.0
        %627 = vmatprep.subr.mxu0 0.0
        %628 = vmatpush2.msra.mxu0 0.0
        %629 = vmatprep.subr.mxu0 0.0
        %630 = vmatpush2.msra.mxu0 0.0
        %631 = vmatprep.subr.mxu0 0.0
        %632 = vmatpush2.msra.mxu0 0.0
        %633 = vmatprep.subr.mxu0 0.0
        %634 = vmatpush2.msra.mxu0 0.0
        %635 = vmatprep.mubr.f32.mxu0 0.0
        %636 = vmatmul.mubr.f32.gmra.mxu0 %v435
        %v637 = vpop.f32.mrf.mxu0
        %v638 = vadd.f32 %v528, %v637
        %v639 = vpop.f32.mrf.mxu0
        %640 = vmatprep.mubr.f32.mxu0 0.0
        %641 = vmatmul.mubr.f32.gmra.mxu0 %v438
        %v642 = vpop.f32.mrf.mxu0
        %v643 = vadd.f32 %v533, %v642
        %v644 = vpop.f32.mrf.mxu0
        %645 = vmatprep.mubr.f32.mxu0 0.0
        %646 = vmatmul.mubr.f32.gmra.mxu0 %v441
        %v647 = vpop.f32.mrf.mxu0
        %v648 = vadd.f32 %v538, %v647
        %v649 = vpop.f32.mrf.mxu0
        %650 = vmatprep.mubr.f32.mxu0 0.0
        %651 = vmatmul.mubr.f32.gmra.mxu0 %v444
        %v652 = vpop.f32.mrf.mxu0
        %v653 = vadd.f32 %v543, %v652
        %v654 = vpop.f32.mrf.mxu0
        %655 = vmatprep.mubr.f32.mxu0 0.0
        %656 = vmatmul.mubr.f32.gmra.mxu0 %v447
        %v657 = vpop.f32.mrf.mxu0
        %v658 = vadd.f32 %v548, %v657
        %v659 = vpop.f32.mrf.mxu0
        %660 = vmatprep.mubr.f32.mxu0 0.0
        %661 = vmatmul.mubr.f32.gmra.mxu0 %v450
        %v662 = vpop.f32.mrf.mxu0
        %v663 = vadd.f32 %v553, %v662
        %v664 = vpop.f32.mrf.mxu0
        %665 = vmatprep.mubr.f32.mxu0 0.0
        %666 = vmatmul.mubr.f32.gmra.mxu0 %v453
        %v667 = vpop.f32.mrf.mxu0
        %v668 = vadd.f32 %v558, %v667
        %v669 = vpop.f32.mrf.mxu0
        %670 = vmatprep.mubr.f32.mxu0 0.0
        %671 = vmatmul.mubr.f32.gmra.mxu0 %v456
        %v672 = vpop.f32.mrf.mxu0
        %v673 = vadd.f32 %v563, %v672
        %v674 = vpop.f32.mrf.mxu0
        %675 = vmatprep.mubr.f32.mxu0 0.0
        %676 = vmatmul.mubr.f32.gmra.mxu0 %v459
        %v677 = vpop.f32.mrf.mxu0
        %v678 = vadd.f32 %v568, %v677
        %v679 = vpop.f32.mrf.mxu0
        %680 = vdwg.mxu0
        %v681 = vmul.f32 %v638, 0.5
        %v682 = vmul.f32 %v643, 0.5
        %v683 = vmul.f32 %v648, 0.5
        %v684 = vmul.f32 %v653, 0.5
        %v685 = vmul.f32 %v658, 0.5
        %v686 = vmul.f32 %v663, 0.5
        %v687 = vmul.f32 %v668, 0.5
        %v688 = vmul.f32 %v673, 0.5
        %v689 = vmul.f32 %v678, 0.5
        %v690 = vmul.f32 %v638, 0.70710677
        %v691 = vmul.f32 %v643, 0.70710677
        %v692 = vmul.f32 %v648, 0.70710677
        %v693 = vmul.f32 %v653, 0.70710677
        %v694 = vmul.f32 %v658, 0.70710677
        %v695 = vmul.f32 %v663, 0.70710677
        %v696 = vmul.f32 %v668, 0.70710677
        %v697 = vmul.f32 %v673, 0.70710677
        %v698 = vmul.f32 %v678, 0.70710677
        %v699 = vand.u32 2147483647, %v690
        %v700 = vand.u32 2147483647, %v691
        %v701 = vand.u32 2147483647, %v692
        %v702 = vand.u32 2147483647, %v693
        %v703 = vand.u32 2147483647, %v694
        %v704 = vand.u32 2147483647, %v695
        %v705 = vand.u32 2147483647, %v696
        %v706 = vand.u32 2147483647, %v697
        %v707 = vand.u32 2147483647, %v698
        %v708 = vmul.f32 %v699, 0.3275911
        %v709 = vmul.f32 %v700, 0.3275911
        %v710 = vmul.f32 %v701, 0.3275911
        %v711 = vmul.f32 %v702, 0.3275911
        %v712 = vmul.f32 %v703, 0.3275911
        %v713 = vmul.f32 %v704, 0.3275911
        %v714 = vmul.f32 %v705, 0.3275911
        %v715 = vmul.f32 %v706, 0.3275911
        %v716 = vmul.f32 %v707, 0.3275911
        %v717 = vadd.f32 %v708, 1.0
        %v718 = vadd.f32 %v709, 1.0
        %v719 = vadd.f32 %v710, 1.0
        %v720 = vadd.f32 %v711, 1.0
        %v721 = vadd.f32 %v712, 1.0
        %v722 = vadd.f32 %v713, 1.0
        %v723 = vadd.f32 %v714, 1.0
        %v724 = vadd.f32 %v715, 1.0
        %v725 = vadd.f32 %v716, 1.0
        %v726 = vrcp.pop %v717
        %v727 = vmul.f32 1.0, %v726
        %v728 = vrcp.pop %v718
        %v729 = vmul.f32 1.0, %v728
        %v730 = vrcp.pop %v719
        %v731 = vmul.f32 1.0, %v730
        %v732 = vrcp.pop %v720
        %v733 = vmul.f32 1.0, %v732
        %v734 = vrcp.pop %v721
        %v735 = vmul.f32 1.0, %v734
        %v736 = vrcp.pop %v722
        %v737 = vmul.f32 1.0, %v736
        %v738 = vrcp.pop %v723
        %v739 = vmul.f32 1.0, %v738
        %v740 = vrcp.pop %v724
        %v741 = vmul.f32 1.0, %v740
        %v742 = vrcp.pop %v725
        %v743 = vmul.f32 1.0, %v742
        %v744 = vmul.f32 %v727, 1.0614054
        %v745 = vmul.f32 %v729, 1.0614054
        %v746 = vmul.f32 %v731, 1.0614054
        %v747 = vmul.f32 %v733, 1.0614054
        %v748 = vmul.f32 %v735, 1.0614054
        %v749 = vmul.f32 %v737, 1.0614054
        %v750 = vmul.f32 %v739, 1.0614054
        %v751 = vmul.f32 %v741, 1.0614054
        %v752 = vmul.f32 %v743, 1.0614054
        %v753 = vadd.f32 %v744, -1.4531521
        %v754 = vadd.f32 %v745, -1.4531521
        %v755 = vadd.f32 %v746, -1.4531521
        %v756 = vadd.f32 %v747, -1.4531521
        %v757 = vadd.f32 %v748, -1.4531521
        %v758 = vadd.f32 %v749, -1.4531521
        %v759 = vadd.f32 %v750, -1.4531521
        %v760 = vadd.f32 %v751, -1.4531521
        %v761 = vadd.f32 %v752, -1.4531521
        %v762 = vmul.f32 %v753, %v727
        %v763 = vmul.f32 %v754, %v729
        %v764 = vmul.f32 %v755, %v731
        %v765 = vmul.f32 %v756, %v733
        %v766 = vmul.f32 %v757, %v735
        %v767 = vmul.f32 %v758, %v737
        %v768 = vmul.f32 %v759, %v739
        %v769 = vmul.f32 %v760, %v741
        %v770 = vmul.f32 %v761, %v743
        %v771 = vadd.f32 %v762, 1.4214138
        %v772 = vadd.f32 %v763, 1.4214138
        %v773 = vadd.f32 %v764, 1.4214138
        %v774 = vadd.f32 %v765, 1.4214138
        %v775 = vadd.f32 %v766, 1.4214138
        %v776 = vadd.f32 %v767, 1.4214138
        %v777 = vadd.f32 %v768, 1.4214138
        %v778 = vadd.f32 %v769, 1.4214138
        %v779 = vadd.f32 %v770, 1.4214138
        %v780 = vmul.f32 %v771, %v727
        %v781 = vmul.f32 %v772, %v729
        %v782 = vmul.f32 %v773, %v731
        %v783 = vmul.f32 %v774, %v733
        %v784 = vmul.f32 %v775, %v735
        %v785 = vmul.f32 %v776, %v737
        %v786 = vmul.f32 %v777, %v739
        %v787 = vmul.f32 %v778, %v741
        %v788 = vmul.f32 %v779, %v743
        %v789 = vadd.f32 %v780, -0.28449672
        %v790 = vadd.f32 %v781, -0.28449672
        %v791 = vadd.f32 %v782, -0.28449672
        %v792 = vadd.f32 %v783, -0.28449672
        %v793 = vadd.f32 %v784, -0.28449672
        %v794 = vadd.f32 %v785, -0.28449672
        %v795 = vadd.f32 %v786, -0.28449672
        %v796 = vadd.f32 %v787, -0.28449672
        %v797 = vadd.f32 %v788, -0.28449672
        %v798 = vmul.f32 %v789, %v727
        %v799 = vmul.f32 %v790, %v729
        %v800 = vmul.f32 %v791, %v731
        %v801 = vmul.f32 %v792, %v733
        %v802 = vmul.f32 %v793, %v735
        %v803 = vmul.f32 %v794, %v737
        %v804 = vmul.f32 %v795, %v739
        %v805 = vmul.f32 %v796, %v741
        %v806 = vmul.f32 %v797, %v743
        %v807 = vadd.f32 %v798, 0.2548296
        %v808 = vadd.f32 %v799, 0.2548296
        %v809 = vadd.f32 %v800, 0.2548296
        %v810 = vadd.f32 %v801, 0.2548296
        %v811 = vadd.f32 %v802, 0.2548296
        %v812 = vadd.f32 %v803, 0.2548296
        %v813 = vadd.f32 %v804, 0.2548296
        %v814 = vadd.f32 %v805, 0.2548296
        %v815 = vadd.f32 %v806, 0.2548296
        %v816 = vmul.f32 %v807, %v727
        %v817 = vmul.f32 %v808, %v729
        %v818 = vmul.f32 %v809, %v731
        %v819 = vmul.f32 %v810, %v733
        %v820 = vmul.f32 %v811, %v735
        %v821 = vmul.f32 %v812, %v737
        %v822 = vmul.f32 %v813, %v739
        %v823 = vmul.f32 %v814, %v741
        %v824 = vmul.f32 %v815, %v743
        %v825 = vsub.f32 0.0, %v699
        %v826 = vsub.f32 0.0, %v700
        %v827 = vsub.f32 0.0, %v701
        %v828 = vsub.f32 0.0, %v702
        %v829 = vsub.f32 0.0, %v703
        %v830 = vsub.f32 0.0, %v704
        %v831 = vsub.f32 0.0, %v705
        %v832 = vsub.f32 0.0, %v706
        %v833 = vsub.f32 0.0, %v707
        %v834 = vmul.f32 %v825, %v699
        %v835 = vmul.f32 %v826, %v700
        %v836 = vmul.f32 %v827, %v701
        %v837 = vmul.f32 %v828, %v702
        %v838 = vmul.f32 %v829, %v703
        %v839 = vmul.f32 %v830, %v704
        %v840 = vmul.f32 %v831, %v705
        %v841 = vmul.f32 %v832, %v706
        %v842 = vmul.f32 %v833, %v707
        %v843 = vmul.f32 %v834, 1.442695
        %v844 = vpow.pop %v843
        %v845 = vmul.f32 %v835, 1.442695
        %v846 = vpow.pop %v845
        %v847 = vmul.f32 %v836, 1.442695
        %v848 = vpow.pop %v847
        %v849 = vmul.f32 %v837, 1.442695
        %v850 = vpow.pop %v849
        %v851 = vmul.f32 %v838, 1.442695
        %v852 = vpow.pop %v851
        %v853 = vmul.f32 %v839, 1.442695
        %v854 = vpow.pop %v853
        %v855 = vmul.f32 %v840, 1.442695
        %v856 = vpow.pop %v855
        %v857 = vmul.f32 %v841, 1.442695
        %v858 = vpow.pop %v857
        %v859 = vmul.f32 %v842, 1.442695
        %v860 = vpow.pop %v859
        %v861 = vmul.f32 %v816, %v844
        %v862 = vmul.f32 %v817, %v846
        %v863 = vmul.f32 %v818, %v848
        %v864 = vmul.f32 %v819, %v850
        %v865 = vmul.f32 %v820, %v852
        %v866 = vmul.f32 %v821, %v854
        %v867 = vmul.f32 %v822, %v856
        %v868 = vmul.f32 %v823, %v858
        %v869 = vmul.f32 %v824, %v860
        %v870 = vsub.f32 1.0, %v861
        %v871 = vsub.f32 1.0, %v862
        %v872 = vsub.f32 1.0, %v863
        %v873 = vsub.f32 1.0, %v864
        %v874 = vsub.f32 1.0, %v865
        %v875 = vsub.f32 1.0, %v866
        %v876 = vsub.f32 1.0, %v867
        %v877 = vsub.f32 1.0, %v868
        %v878 = vsub.f32 1.0, %v869
        %vm879 = vcmp.ge.f32.partialorder %v690, 0.0
        %vm880 = vcmp.ge.f32.partialorder %v691, 0.0
        %vm881 = vcmp.ge.f32.partialorder %v692, 0.0
        %vm882 = vcmp.ge.f32.partialorder %v693, 0.0
        %vm883 = vcmp.ge.f32.partialorder %v694, 0.0
        %vm884 = vcmp.ge.f32.partialorder %v695, 0.0
        %vm885 = vcmp.ge.f32.partialorder %v696, 0.0
        %vm886 = vcmp.ge.f32.partialorder %v697, 0.0
        %vm887 = vcmp.ge.f32.partialorder %v698, 0.0
        %v888 = vsub.f32 0.0, %v870
        %v889 = vsub.f32 0.0, %v871
        %v890 = vsub.f32 0.0, %v872
        %v891 = vsub.f32 0.0, %v873
        %v892 = vsub.f32 0.0, %v874
        %v893 = vsub.f32 0.0, %v875
        %v894 = vsub.f32 0.0, %v876
        %v895 = vsub.f32 0.0, %v877
        %v896 = vsub.f32 0.0, %v878
        %v897 = vsel %vm879, %v870, %v888
        %v898 = vsel %vm880, %v871, %v889
        %v899 = vsel %vm881, %v872, %v890
        %v900 = vsel %vm882, %v873, %v891
        %v901 = vsel %vm883, %v874, %v892
        %v902 = vsel %vm884, %v875, %v893
        %v903 = vsel %vm885, %v876, %v894
        %v904 = vsel %vm886, %v877, %v895
        %v905 = vsel %vm887, %v878, %v896
        %v906 = vadd.f32 %v897, 1.0
        %v907 = vadd.f32 %v898, 1.0
        %v908 = vadd.f32 %v899, 1.0
        %v909 = vadd.f32 %v900, 1.0
        %v910 = vadd.f32 %v901, 1.0
        %v911 = vadd.f32 %v902, 1.0
        %v912 = vadd.f32 %v903, 1.0
        %v913 = vadd.f32 %v904, 1.0
        %v914 = vadd.f32 %v905, 1.0
        %v915 = vmul.f32 %v681, %v906
        %v916 = vmul.f32 %v682, %v907
        %v917 = vmul.f32 %v683, %v908
        %v918 = vmul.f32 %v684, %v909
        %v919 = vmul.f32 %v685, %v910
        %v920 = vmul.f32 %v686, %v911
        %v921 = vmul.f32 %v687, %v912
        %v922 = vmul.f32 %v688, %v913
        %v923 = vmul.f32 %v689, %v914
        %v924 = vld [vmem:[#allocation2] sm:$0xff]
        %v925 = vld [vmem:[#allocation2 + $0x8] sm:$0xff]
        %v926 = vld [vmem:[%s5] sm:$0x1]
        %v928 = vlaneseq
        %v929 = vshrl.u32 %v928, 7
        %v930 = vsub.s32 0, %v929
        %v931 = vrot.slane %v926, %v930
        %vm933 = vcmask 130048
        %v935 = vsel %vm933, %v915, 0
        %v938 = vsel %vm933, %v916, 0
        %v941 = vsel %vm933, %v917, 0
        %v944 = vsel %vm933, %v918, 0
        %v947 = vsel %vm933, %v919, 0
        %v950 = vsel %vm933, %v920, 0
        %v953 = vsel %vm933, %v921, 0
        %v956 = vsel %vm933, %v922, 0
        %v959 = vsel %vm933, %v923, 0
        %961 = vmatprep.subr.mxu0 0.0
        %962 = vmatpush1.msra.mxu0 0.0
        %963 = vmatprep.subr.mxu0 0.0
        %964 = vmatpush1.msra.mxu0 0.0
        %965 = vmatprep.subr.mxu0 0.0
        %966 = vmatpush1.msra.mxu0 0.0
        %967 = vmatprep.subr.mxu0 0.0
        %968 = vmatpush1.msra.mxu0 0.0
        %969 = vmatprep.subr.mxu0 0.0
        %970 = vmatpush1.msra.mxu0 0.0
        %971 = vmatprep.subr.mxu0 0.0
        %972 = vmatpush1.msra.mxu0 0.0
        %973 = vmatprep.subr.mxu0 0.0
        %974 = vmatpush1.msra.mxu0 0.0
        %975 = vmatprep.subr.mxu0 0.0
        %976 = vmatpush1.msra.mxu0 0.0
        %977 = vmatprep.subr.mxu0 0.0
        %978 = vmatpush1.msra.mxu0 0.0
        %979 = vmatprep.subr.mxu0 0.0
        %980 = vmatpush1.msra.mxu0 0.0
        %981 = vmatprep.subr.mxu0 0.0
        %982 = vmatpush1.msra.mxu0 0.0
        %983 = vmatprep.subr.mxu0 0.0
        %984 = vmatpush1.msra.mxu0 0.0
        %985 = vmatprep.subr.mxu0 0.0
        %986 = vmatpush1.msra.mxu0 0.0
        %987 = vmatprep.subr.mxu0 0.0
        %988 = vmatpush1.msra.mxu0 0.0
        %989 = vmatprep.subr.mxu0 0.0
        %990 = vmatpush1.msra.mxu0 %v925
        %991 = vmatprep.subr.mxu0 0.0
        %992 = vmatpush1.msra.mxu0 %v924
        %993 = vmatprep.subr.mxu0 0.0
        %994 = vmatpush2.msra.mxu0 0.0
        %995 = vmatprep.subr.mxu0 0.0
        %996 = vmatpush2.msra.mxu0 0.0
        %997 = vmatprep.subr.mxu0 0.0
        %998 = vmatpush2.msra.mxu0 0.0
        %999 = vmatprep.subr.mxu0 0.0
        %1000 = vmatpush2.msra.mxu0 0.0
        %1001 = vmatprep.subr.mxu0 0.0
        %1002 = vmatpush2.msra.mxu0 0.0
        %1003 = vmatprep.subr.mxu0 0.0
        %1004 = vmatpush2.msra.mxu0 0.0
        %1005 = vmatprep.subr.mxu0 0.0
        %1006 = vmatpush2.msra.mxu0 0.0
        %1007 = vmatprep.subr.mxu0 0.0
        %1008 = vmatpush2.msra.mxu0 0.0
        %1009 = vmatprep.subr.mxu0 0.0
        %1010 = vmatpush2.msra.mxu0 0.0
        %1011 = vmatprep.subr.mxu0 0.0
        %1012 = vmatpush2.msra.mxu0 0.0
        %1013 = vmatprep.subr.mxu0 0.0
        %1014 = vmatpush2.msra.mxu0 0.0
        %1015 = vmatprep.subr.mxu0 0.0
        %1016 = vmatpush2.msra.mxu0 0.0
        %1017 = vmatprep.subr.mxu0 0.0
        %1018 = vmatpush2.msra.mxu0 0.0
        %1019 = vmatprep.subr.mxu0 0.0
        %1020 = vmatpush2.msra.mxu0 0.0
        %1021 = vmatprep.subr.mxu0 0.0
        %1022 = vmatpush2.msra.mxu0 0.0
        %1023 = vmatprep.subr.mxu0 0.0
        %1024 = vmatpush2.msra.mxu0 0.0
        %1025 = vmatprep.mubr.f32.mxu0 0.0
        %1026 = vmatmul.mubr.f32.gmra.mxu0 %v935
        %v1027 = vpop.f32.mrf.mxu0
        %v1028 = vadd.f32 %v931, %v1027
        %v1029 = vpop.f32.mrf.mxu0
        %1030 = vmatprep.mubr.f32.mxu0 0.0
        %1031 = vmatmul.mubr.f32.gmra.mxu0 %v938
        %v1032 = vpop.f32.mrf.mxu0
        %v1033 = vadd.f32 %v931, %v1032
        %v1034 = vpop.f32.mrf.mxu0
        %1035 = vmatprep.mubr.f32.mxu0 0.0
        %1036 = vmatmul.mubr.f32.gmra.mxu0 %v941
        %v1037 = vpop.f32.mrf.mxu0
        %v1038 = vadd.f32 %v931, %v1037
        %v1039 = vpop.f32.mrf.mxu0
        %1040 = vmatprep.mubr.f32.mxu0 0.0
        %1041 = vmatmul.mubr.f32.gmra.mxu0 %v944
        %v1042 = vpop.f32.mrf.mxu0
        %v1043 = vadd.f32 %v931, %v1042
        %v1044 = vpop.f32.mrf.mxu0
        %1045 = vmatprep.mubr.f32.mxu0 0.0
        %1046 = vmatmul.mubr.f32.gmra.mxu0 %v947
        %v1047 = vpop.f32.mrf.mxu0
        %v1048 = vadd.f32 %v931, %v1047
        %v1049 = vpop.f32.mrf.mxu0
        %1050 = vmatprep.mubr.f32.mxu0 0.0
        %1051 = vmatmul.mubr.f32.gmra.mxu0 %v950
        %v1052 = vpop.f32.mrf.mxu0
        %v1053 = vadd.f32 %v931, %v1052
        %v1054 = vpop.f32.mrf.mxu0
        %1055 = vmatprep.mubr.f32.mxu0 0.0
        %1056 = vmatmul.mubr.f32.gmra.mxu0 %v953
        %v1057 = vpop.f32.mrf.mxu0
        %v1058 = vadd.f32 %v931, %v1057
        %v1059 = vpop.f32.mrf.mxu0
        %1060 = vmatprep.mubr.f32.mxu0 0.0
        %1061 = vmatmul.mubr.f32.gmra.mxu0 %v956
        %v1062 = vpop.f32.mrf.mxu0
        %v1063 = vadd.f32 %v931, %v1062
        %v1064 = vpop.f32.mrf.mxu0
        %1065 = vmatprep.mubr.f32.mxu0 0.0
        %1066 = vmatmul.mubr.f32.gmra.mxu0 %v959
        %v1067 = vpop.f32.mrf.mxu0
        %v1068 = vadd.f32 %v931, %v1067
        %v1069 = vpop.f32.mrf.mxu0
        %1070 = vdwg.mxu0
        %v1071 = vmul.f32 %v1028, 0.5
        %v1072 = vmul.f32 %v1033, 0.5
        %v1073 = vmul.f32 %v1038, 0.5
        %v1074 = vmul.f32 %v1043, 0.5
        %v1075 = vmul.f32 %v1048, 0.5
        %v1076 = vmul.f32 %v1053, 0.5
        %v1077 = vmul.f32 %v1058, 0.5
        %v1078 = vmul.f32 %v1063, 0.5
        %v1079 = vmul.f32 %v1068, 0.5
        %v1080 = vmul.f32 %v1028, 0.70710677
        %v1081 = vmul.f32 %v1033, 0.70710677
        %v1082 = vmul.f32 %v1038, 0.70710677
        %v1083 = vmul.f32 %v1043, 0.70710677
        %v1084 = vmul.f32 %v1048, 0.70710677
        %v1085 = vmul.f32 %v1053, 0.70710677
        %v1086 = vmul.f32 %v1058, 0.70710677
        %v1087 = vmul.f32 %v1063, 0.70710677
        %v1088 = vmul.f32 %v1068, 0.70710677
        %v1089 = vand.u32 2147483647, %v1080
        %v1090 = vand.u32 2147483647, %v1081
        %v1091 = vand.u32 2147483647, %v1082
        %v1092 = vand.u32 2147483647, %v1083
        %v1093 = vand.u32 2147483647, %v1084
        %v1094 = vand.u32 2147483647, %v1085
        %v1095 = vand.u32 2147483647, %v1086
        %v1096 = vand.u32 2147483647, %v1087
        %v1097 = vand.u32 2147483647, %v1088
        %v1098 = vmul.f32 %v1089, 0.3275911
        %v1099 = vmul.f32 %v1090, 0.3275911
        %v1100 = vmul.f32 %v1091, 0.3275911
        %v1101 = vmul.f32 %v1092, 0.3275911
        %v1102 = vmul.f32 %v1093, 0.3275911
        %v1103 = vmul.f32 %v1094, 0.3275911
        %v1104 = vmul.f32 %v1095, 0.3275911
        %v1105 = vmul.f32 %v1096, 0.3275911
        %v1106 = vmul.f32 %v1097, 0.3275911
        %v1107 = vadd.f32 %v1098, 1.0
        %v1108 = vadd.f32 %v1099, 1.0
        %v1109 = vadd.f32 %v1100, 1.0
        %v1110 = vadd.f32 %v1101, 1.0
        %v1111 = vadd.f32 %v1102, 1.0
        %v1112 = vadd.f32 %v1103, 1.0
        %v1113 = vadd.f32 %v1104, 1.0
        %v1114 = vadd.f32 %v1105, 1.0
        %v1115 = vadd.f32 %v1106, 1.0
        %v1116 = vrcp.pop %v1107
        %v1117 = vmul.f32 1.0, %v1116
        %v1118 = vrcp.pop %v1108
        %v1119 = vmul.f32 1.0, %v1118
        %v1120 = vrcp.pop %v1109
        %v1121 = vmul.f32 1.0, %v1120
        %v1122 = vrcp.pop %v1110
        %v1123 = vmul.f32 1.0, %v1122
        %v1124 = vrcp.pop %v1111
        %v1125 = vmul.f32 1.0, %v1124
        %v1126 = vrcp.pop %v1112
        %v1127 = vmul.f32 1.0, %v1126
        %v1128 = vrcp.pop %v1113
        %v1129 = vmul.f32 1.0, %v1128
        %v1130 = vrcp.pop %v1114
        %v1131 = vmul.f32 1.0, %v1130
        %v1132 = vrcp.pop %v1115
        %v1133 = vmul.f32 1.0, %v1132
        %v1134 = vmul.f32 %v1117, 1.0614054
        %v1135 = vmul.f32 %v1119, 1.0614054
        %v1136 = vmul.f32 %v1121, 1.0614054
        %v1137 = vmul.f32 %v1123, 1.0614054
        %v1138 = vmul.f32 %v1125, 1.0614054
        %v1139 = vmul.f32 %v1127, 1.0614054
        %v1140 = vmul.f32 %v1129, 1.0614054
        %v1141 = vmul.f32 %v1131, 1.0614054
        %v1142 = vmul.f32 %v1133, 1.0614054
        %v1143 = vadd.f32 %v1134, -1.4531521
        %v1144 = vadd.f32 %v1135, -1.4531521
        %v1145 = vadd.f32 %v1136, -1.4531521
        %v1146 = vadd.f32 %v1137, -1.4531521
        %v1147 = vadd.f32 %v1138, -1.4531521
        %v1148 = vadd.f32 %v1139, -1.4531521
        %v1149 = vadd.f32 %v1140, -1.4531521
        %v1150 = vadd.f32 %v1141, -1.4531521
        %v1151 = vadd.f32 %v1142, -1.4531521
        %v1152 = vmul.f32 %v1143, %v1117
        %v1153 = vmul.f32 %v1144, %v1119
        %v1154 = vmul.f32 %v1145, %v1121
        %v1155 = vmul.f32 %v1146, %v1123
        %v1156 = vmul.f32 %v1147, %v1125
        %v1157 = vmul.f32 %v1148, %v1127
        %v1158 = vmul.f32 %v1149, %v1129
        %v1159 = vmul.f32 %v1150, %v1131
        %v1160 = vmul.f32 %v1151, %v1133
        %v1161 = vadd.f32 %v1152, 1.4214138
        %v1162 = vadd.f32 %v1153, 1.4214138
        %v1163 = vadd.f32 %v1154, 1.4214138
        %v1164 = vadd.f32 %v1155, 1.4214138
        %v1165 = vadd.f32 %v1156, 1.4214138
        %v1166 = vadd.f32 %v1157, 1.4214138
        %v1167 = vadd.f32 %v1158, 1.4214138
        %v1168 = vadd.f32 %v1159, 1.4214138
        %v1169 = vadd.f32 %v1160, 1.4214138
        %v1170 = vmul.f32 %v1161, %v1117
        %v1171 = vmul.f32 %v1162, %v1119
        %v1172 = vmul.f32 %v1163, %v1121
        %v1173 = vmul.f32 %v1164, %v1123
        %v1174 = vmul.f32 %v1165, %v1125
        %v1175 = vmul.f32 %v1166, %v1127
        %v1176 = vmul.f32 %v1167, %v1129
        %v1177 = vmul.f32 %v1168, %v1131
        %v1178 = vmul.f32 %v1169, %v1133
        %v1179 = vadd.f32 %v1170, -0.28449672
        %v1180 = vadd.f32 %v1171, -0.28449672
        %v1181 = vadd.f32 %v1172, -0.28449672
        %v1182 = vadd.f32 %v1173, -0.28449672
        %v1183 = vadd.f32 %v1174, -0.28449672
        %v1184 = vadd.f32 %v1175, -0.28449672
        %v1185 = vadd.f32 %v1176, -0.28449672
        %v1186 = vadd.f32 %v1177, -0.28449672
        %v1187 = vadd.f32 %v1178, -0.28449672
        %v1188 = vmul.f32 %v1179, %v1117
        %v1189 = vmul.f32 %v1180, %v1119
        %v1190 = vmul.f32 %v1181, %v1121
        %v1191 = vmul.f32 %v1182, %v1123
        %v1192 = vmul.f32 %v1183, %v1125
        %v1193 = vmul.f32 %v1184, %v1127
        %v1194 = vmul.f32 %v1185, %v1129
        %v1195 = vmul.f32 %v1186, %v1131
        %v1196 = vmul.f32 %v1187, %v1133
        %v1197 = vadd.f32 %v1188, 0.2548296
        %v1198 = vadd.f32 %v1189, 0.2548296
        %v1199 = vadd.f32 %v1190, 0.2548296
        %v1200 = vadd.f32 %v1191, 0.2548296
        %v1201 = vadd.f32 %v1192, 0.2548296
        %v1202 = vadd.f32 %v1193, 0.2548296
        %v1203 = vadd.f32 %v1194, 0.2548296
        %v1204 = vadd.f32 %v1195, 0.2548296
        %v1205 = vadd.f32 %v1196, 0.2548296
        %v1206 = vmul.f32 %v1197, %v1117
        %v1207 = vmul.f32 %v1198, %v1119
        %v1208 = vmul.f32 %v1199, %v1121
        %v1209 = vmul.f32 %v1200, %v1123
        %v1210 = vmul.f32 %v1201, %v1125
        %v1211 = vmul.f32 %v1202, %v1127
        %v1212 = vmul.f32 %v1203, %v1129
        %v1213 = vmul.f32 %v1204, %v1131
        %v1214 = vmul.f32 %v1205, %v1133
        %v1215 = vsub.f32 0.0, %v1089
        %v1216 = vsub.f32 0.0, %v1090
        %v1217 = vsub.f32 0.0, %v1091
        %v1218 = vsub.f32 0.0, %v1092
        %v1219 = vsub.f32 0.0, %v1093
        %v1220 = vsub.f32 0.0, %v1094
        %v1221 = vsub.f32 0.0, %v1095
        %v1222 = vsub.f32 0.0, %v1096
        %v1223 = vsub.f32 0.0, %v1097
        %v1224 = vmul.f32 %v1215, %v1089
        %v1225 = vmul.f32 %v1216, %v1090
        %v1226 = vmul.f32 %v1217, %v1091
        %v1227 = vmul.f32 %v1218, %v1092
        %v1228 = vmul.f32 %v1219, %v1093
        %v1229 = vmul.f32 %v1220, %v1094
        %v1230 = vmul.f32 %v1221, %v1095
        %v1231 = vmul.f32 %v1222, %v1096
        %v1232 = vmul.f32 %v1223, %v1097
        %v1233 = vmul.f32 %v1224, 1.442695
        %v1234 = vpow.pop %v1233
        %v1235 = vmul.f32 %v1225, 1.442695
        %v1236 = vpow.pop %v1235
        %v1237 = vmul.f32 %v1226, 1.442695
        %v1238 = vpow.pop %v1237
        %v1239 = vmul.f32 %v1227, 1.442695
        %v1240 = vpow.pop %v1239
        %v1241 = vmul.f32 %v1228, 1.442695
        %v1242 = vpow.pop %v1241
        %v1243 = vmul.f32 %v1229, 1.442695
        %v1244 = vpow.pop %v1243
        %v1245 = vmul.f32 %v1230, 1.442695
        %v1246 = vpow.pop %v1245
        %v1247 = vmul.f32 %v1231, 1.442695
        %v1248 = vpow.pop %v1247
        %v1249 = vmul.f32 %v1232, 1.442695
        %v1250 = vpow.pop %v1249
        %v1251 = vmul.f32 %v1206, %v1234
        %v1252 = vmul.f32 %v1207, %v1236
        %v1253 = vmul.f32 %v1208, %v1238
        %v1254 = vmul.f32 %v1209, %v1240
        %v1255 = vmul.f32 %v1210, %v1242
        %v1256 = vmul.f32 %v1211, %v1244
        %v1257 = vmul.f32 %v1212, %v1246
        %v1258 = vmul.f32 %v1213, %v1248
        %v1259 = vmul.f32 %v1214, %v1250
        %v1260 = vsub.f32 1.0, %v1251
        %v1261 = vsub.f32 1.0, %v1252
        %v1262 = vsub.f32 1.0, %v1253
        %v1263 = vsub.f32 1.0, %v1254
        %v1264 = vsub.f32 1.0, %v1255
        %v1265 = vsub.f32 1.0, %v1256
        %v1266 = vsub.f32 1.0, %v1257
        %v1267 = vsub.f32 1.0, %v1258
        %v1268 = vsub.f32 1.0, %v1259
        %vm1269 = vcmp.ge.f32.partialorder %v1080, 0.0
        %vm1270 = vcmp.ge.f32.partialorder %v1081, 0.0
        %vm1271 = vcmp.ge.f32.partialorder %v1082, 0.0
        %vm1272 = vcmp.ge.f32.partialorder %v1083, 0.0
        %vm1273 = vcmp.ge.f32.partialorder %v1084, 0.0
        %vm1274 = vcmp.ge.f32.partialorder %v1085, 0.0
        %vm1275 = vcmp.ge.f32.partialorder %v1086, 0.0
        %vm1276 = vcmp.ge.f32.partialorder %v1087, 0.0
        %vm1277 = vcmp.ge.f32.partialorder %v1088, 0.0
        %v1278 = vsub.f32 0.0, %v1260
        %v1279 = vsub.f32 0.0, %v1261
        %v1280 = vsub.f32 0.0, %v1262
        %v1281 = vsub.f32 0.0, %v1263
        %v1282 = vsub.f32 0.0, %v1264
        %v1283 = vsub.f32 0.0, %v1265
        %v1284 = vsub.f32 0.0, %v1266
        %v1285 = vsub.f32 0.0, %v1267
        %v1286 = vsub.f32 0.0, %v1268
        %v1287 = vsel %vm1269, %v1260, %v1278
        %v1288 = vsel %vm1270, %v1261, %v1279
        %v1289 = vsel %vm1271, %v1262, %v1280
        %v1290 = vsel %vm1272, %v1263, %v1281
        %v1291 = vsel %vm1273, %v1264, %v1282
        %v1292 = vsel %vm1274, %v1265, %v1283
        %v1293 = vsel %vm1275, %v1266, %v1284
        %v1294 = vsel %vm1276, %v1267, %v1285
        %v1295 = vsel %vm1277, %v1268, %v1286
        %v1296 = vadd.f32 %v1287, 1.0
        %v1297 = vadd.f32 %v1288, 1.0
        %v1298 = vadd.f32 %v1289, 1.0
        %v1299 = vadd.f32 %v1290, 1.0
        %v1300 = vadd.f32 %v1291, 1.0
        %v1301 = vadd.f32 %v1292, 1.0
        %v1302 = vadd.f32 %v1293, 1.0
        %v1303 = vadd.f32 %v1294, 1.0
        %v1304 = vadd.f32 %v1295, 1.0
        %v1305 = vmul.f32 %v1071, %v1296
        %v1306 = vmul.f32 %v1072, %v1297
        %v1307 = vmul.f32 %v1073, %v1298
        %v1308 = vmul.f32 %v1074, %v1299
        %v1309 = vmul.f32 %v1075, %v1300
        %v1310 = vmul.f32 %v1076, %v1301
        %v1311 = vmul.f32 %v1077, %v1302
        %v1312 = vmul.f32 %v1078, %v1303
        %v1313 = vmul.f32 %v1079, %v1304
        %v1314 = vld [vmem:[%s6] sm:$0xff]
        %v1315 = vld [vmem:[%s6 + $0x8] sm:$0xff]
        %v1316 = vld [vmem:[%s6 + $0x10] sm:$0xff]
        %v1317 = vld [vmem:[%s6 + $0x18] sm:$0xff]
        %v1318 = vld [vmem:[%s7] sm:$0x1]
        %v1320 = vlaneseq
        %v1321 = vshrl.u32 %v1320, 7
        %v1322 = vsub.s32 0, %v1321
        %v1323 = vrot.slane %v1318, %v1322
        %v1326 = vsel %vm329, %v1305, 0
        %v1329 = vsel %vm329, %v1306, 0
        %v1332 = vsel %vm329, %v1307, 0
        %v1335 = vsel %vm329, %v1308, 0
        %v1338 = vsel %vm329, %v1309, 0
        %v1341 = vsel %vm329, %v1310, 0
        %v1344 = vsel %vm329, %v1311, 0
        %v1347 = vsel %vm329, %v1312, 0
        %v1350 = vsel %vm329, %v1313, 0
        %1352 = vmatprep.subr.mxu0 0.0
        %1353 = vmatpush1.msra.mxu0 0.0
        %1354 = vmatprep.subr.mxu0 0.0
        %1355 = vmatpush1.msra.mxu0 0.0
        %1356 = vmatprep.subr.mxu0 0.0
        %1357 = vmatpush1.msra.mxu0 0.0
        %1358 = vmatprep.subr.mxu0 0.0
        %1359 = vmatpush1.msra.mxu0 0.0
        %1360 = vmatprep.subr.mxu0 0.0
        %1361 = vmatpush1.msra.mxu0 0.0
        %1362 = vmatprep.subr.mxu0 0.0
        %1363 = vmatpush1.msra.mxu0 0.0
        %1364 = vmatprep.subr.mxu0 0.0
        %1365 = vmatpush1.msra.mxu0 0.0
        %1366 = vmatprep.subr.mxu0 0.0
        %1367 = vmatpush1.msra.mxu0 0.0
        %1368 = vmatprep.subr.mxu0 0.0
        %1369 = vmatpush1.msra.mxu0 0.0
        %1370 = vmatprep.subr.mxu0 0.0
        %1371 = vmatpush1.msra.mxu0 0.0
        %1372 = vmatprep.subr.mxu0 0.0
        %1373 = vmatpush1.msra.mxu0 0.0
        %1374 = vmatprep.subr.mxu0 0.0
        %1375 = vmatpush1.msra.mxu0 0.0
        %1376 = vmatprep.subr.mxu0 0.0
        %1377 = vmatpush1.msra.mxu0 %v1317
        %1378 = vmatprep.subr.mxu0 0.0
        %1379 = vmatpush1.msra.mxu0 %v1316
        %1380 = vmatprep.subr.mxu0 0.0
        %1381 = vmatpush1.msra.mxu0 %v1315
        %1382 = vmatprep.subr.mxu0 0.0
        %1383 = vmatpush1.msra.mxu0 %v1314
        %1384 = vmatprep.subr.mxu0 0.0
        %1385 = vmatpush2.msra.mxu0 0.0
        %1386 = vmatprep.subr.mxu0 0.0
        %1387 = vmatpush2.msra.mxu0 0.0
        %1388 = vmatprep.subr.mxu0 0.0
        %1389 = vmatpush2.msra.mxu0 0.0
        %1390 = vmatprep.subr.mxu0 0.0
        %1391 = vmatpush2.msra.mxu0 0.0
        %1392 = vmatprep.subr.mxu0 0.0
        %1393 = vmatpush2.msra.mxu0 0.0
        %1394 = vmatprep.subr.mxu0 0.0
        %1395 = vmatpush2.msra.mxu0 0.0
        %1396 = vmatprep.subr.mxu0 0.0
        %1397 = vmatpush2.msra.mxu0 0.0
        %1398 = vmatprep.subr.mxu0 0.0
        %1399 = vmatpush2.msra.mxu0 0.0
        %1400 = vmatprep.subr.mxu0 0.0
        %1401 = vmatpush2.msra.mxu0 0.0
        %1402 = vmatprep.subr.mxu0 0.0
        %1403 = vmatpush2.msra.mxu0 0.0
        %1404 = vmatprep.subr.mxu0 0.0
        %1405 = vmatpush2.msra.mxu0 0.0
        %1406 = vmatprep.subr.mxu0 0.0
        %1407 = vmatpush2.msra.mxu0 0.0
        %1408 = vmatprep.subr.mxu0 0.0
        %1409 = vmatpush2.msra.mxu0 0.0
        %1410 = vmatprep.subr.mxu0 0.0
        %1411 = vmatpush2.msra.mxu0 0.0
        %1412 = vmatprep.subr.mxu0 0.0
        %1413 = vmatpush2.msra.mxu0 0.0
        %1414 = vmatprep.subr.mxu0 0.0
        %1415 = vmatpush2.msra.mxu0 0.0
        %1416 = vmatprep.mubr.f32.mxu0 0.0
        %1417 = vmatmul.mubr.f32.gmra.mxu0 %v1326
        %v1418 = vpop.f32.mrf.mxu0
        %v1419 = vadd.f32 %v1323, %v1418
        %v1420 = vpop.f32.mrf.mxu0
        %1421 = vmatprep.mubr.f32.mxu0 0.0
        %1422 = vmatmul.mubr.f32.gmra.mxu0 %v1329
        %v1423 = vpop.f32.mrf.mxu0
        %v1424 = vadd.f32 %v1323, %v1423
        %v1425 = vpop.f32.mrf.mxu0
        %1426 = vmatprep.mubr.f32.mxu0 0.0
        %1427 = vmatmul.mubr.f32.gmra.mxu0 %v1332
        %v1428 = vpop.f32.mrf.mxu0
        %v1429 = vadd.f32 %v1323, %v1428
        %v1430 = vpop.f32.mrf.mxu0
        %1431 = vmatprep.mubr.f32.mxu0 0.0
        %1432 = vmatmul.mubr.f32.gmra.mxu0 %v1335
        %v1433 = vpop.f32.mrf.mxu0
        %v1434 = vadd.f32 %v1323, %v1433
        %v1435 = vpop.f32.mrf.mxu0
        %1436 = vmatprep.mubr.f32.mxu0 0.0
        %1437 = vmatmul.mubr.f32.gmra.mxu0 %v1338
        %v1438 = vpop.f32.mrf.mxu0
        %v1439 = vadd.f32 %v1323, %v1438
        %v1440 = vpop.f32.mrf.mxu0
        %1441 = vmatprep.mubr.f32.mxu0 0.0
        %1442 = vmatmul.mubr.f32.gmra.mxu0 %v1341
        %v1443 = vpop.f32.mrf.mxu0
        %v1444 = vadd.f32 %v1323, %v1443
        %v1445 = vpop.f32.mrf.mxu0
        %1446 = vmatprep.mubr.f32.mxu0 0.0
        %1447 = vmatmul.mubr.f32.gmra.mxu0 %v1344
        %v1448 = vpop.f32.mrf.mxu0
        %v1449 = vadd.f32 %v1323, %v1448
        %v1450 = vpop.f32.mrf.mxu0
        %1451 = vmatprep.mubr.f32.mxu0 0.0
        %1452 = vmatmul.mubr.f32.gmra.mxu0 %v1347
        %v1453 = vpop.f32.mrf.mxu0
        %v1454 = vadd.f32 %v1323, %v1453
        %v1455 = vpop.f32.mrf.mxu0
        %1456 = vmatprep.mubr.f32.mxu0 0.0
        %1457 = vmatmul.mubr.f32.gmra.mxu0 %v1350
        %v1458 = vpop.f32.mrf.mxu0
        %v1459 = vadd.f32 %v1323, %v1458
        %v1460 = vpop.f32.mrf.mxu0
        %1461 = vdwg.mxu0
        %1462 = vst [vmem:[%s317] sm:$0xff] %v1419
        %1463 = vst [vmem:[%s317 + $0x8] sm:$0xff] %v1424
        %1464 = vst [vmem:[%s317 + $0x10] sm:$0xff] %v1429
        %1465 = vst [vmem:[%s317 + $0x18] sm:$0xff] %v1434
        %1466 = vst [vmem:[%s317 + $0x20] sm:$0xff] %v1439
        %1467 = vst [vmem:[%s317 + $0x28] sm:$0xff] %v1444
        %1468 = vst [vmem:[%s317 + $0x30] sm:$0xff] %v1449
        %1469 = vst [vmem:[%s317 + $0x38] sm:$0xff] %v1454
        %1470 = vst [vmem:[%s317 + $0x40] sm:$0xff] %v1459
        %p1471 = scmp.lt.s32.totalorder %s20, 1
        %s1472 = scalar_select %p1471, %s20, 1
        %s1473 = smul.addr %s1472, 9
        %s1474 = smul.addr %s1473, 8
        %s1475 = scalar_lea.vmem %s8, %s1474
        // Predicated region
        $region57: #{forward.1} parent=51 // pred_check
          %p1476 = pneg %p211
        $region58: #{forward.1} parent=51 // pred_check_branch
          %1478 = sbr.rel (%p1476) target = $region60
        $region59: #{forward.1} parent=51 // pred_region
          _
        $region60: #{forward.1} parent=51 // pred_fallthru
          _
      $region52: #{forward.1} parent=5 // pred_fallthru
        _
      %p1479 = scmp.le.s32.totalorder 2, %s15
      // Predicated region
      $region61: #{forward.1} parent=5 // pred_check
        %p1480 = pneg %p1479
      $region62: #{forward.1} parent=5 // pred_check_branch
        %1482 = sbr.rel (%p1480) target = $region64
      $region63: #{forward.1} parent=5 // pred_region
        %s1483 = ssub.s32 %s15, 2
        // Predicated region
        $region65: #{forward.1} parent=63 // pred_check
          %p1484 = pneg %p217
        $region66: #{forward.1} parent=63 // pred_check_branch
          %1486 = sbr.rel (%p1484) target = $region68
        $region67: #{forward.1} parent=63 // pred_region
          %p1487 = scmp.lt.s32.totalorder %s21, 1
          %s1488 = scalar_select %p1487, %s21, 1
          %s1489 = smul.addr %s1488, 9
          %s1490 = smul.addr %s1489, 8
          %s1491 = scalar_lea.vmem %s8, %s1490
        $region68: #{forward.1} parent=63 // pred_fallthru
          _
      $region64: #{forward.1} parent=5 // pred_fallthru
        _
    $region6: #{forward.1} parent=1 // loop_footer
      %s19 = sadd.s32 1, %s15
    $region7: #{forward.1} parent=1 // loop_footer_branch
      %14 = sbr.rel target = $region3
    $region8: #{forward.1} parent=1 // loop_exit
      _
    %1492 = vsyncpa [#allocation3], 1
    %s1493 = scalar_lea.sflag [#allocation3], 1
    %1494 = vsyncpa %s1493, 1

</llo_original>
